<compile_context>
chip_gen: v6e
topology: v6e:2x2x1
jax: 0.10.0
libtpu: 0.0.40
codegen_flags: <defaults>
</compile_context>

<pallas_src>
import math

import jax
import jax.numpy as jnp
from jax.experimental import pallas as pl
from jax.experimental.pallas import tpu as pltpu

LN_EPS = 1e-5  # torch.nn.LayerNorm default


# ---------------------------------------------------------------------------
# In-kernel helpers
# ---------------------------------------------------------------------------
def _layernorm(x, gamma, beta):
    mean = jnp.mean(x, axis=-1, keepdims=True)
    var = jnp.mean((x - mean) ** 2, axis=-1, keepdims=True)
    return (x - mean) * jax.lax.rsqrt(var + LN_EPS) * gamma + beta


# ---------------------------------------------------------------------------
# Fused EncoderLayer kernel (one batch element per grid step)
# ---------------------------------------------------------------------------
def _make_encoder_layer_kernel(flag, H, W, D, Dff, activation):
    bf16 = jnp.bfloat16

    def kernel(x_ref, pe_ref, wqkv_ref, bqkv_ref, wo_ref, w1_ref, w2_ref,
               vecd_ref, bf1_ref, *rest):
        if flag == 'SA':
            dww_ref, dwb_ref, o_ref = rest
        else:
            (o_ref,) = rest

        # ---- PositionalEncoding (dropout p=0.0 -> identity) ----
        x = x_ref[0] + pe_ref[...]                       # (L, D), f32

        vd = vecd_ref[...]                               # (8, D) packed f32
        pre_g, pre_b = vd[0:1], vd[1:2]
        n1_g, n1_b = vd[2:3], vd[3:4]
        n2_g, n2_b = vd[4:5], vd[5:6]
        bo, bf2 = vd[6:7], vd[7:8]

        # ---- pre_norm + single-head self-attention (fused QKV) ----
        y = _layernorm(x, pre_g, pre_b)
        qkv = jnp.dot(y.astype(bf16), wqkv_ref[...],
                      preferred_element_type=jnp.float32) + bqkv_ref[...]
        q, k, v = qkv[:, :D], qkv[:, D:2 * D], qkv[:, 2 * D:]
        # 1/sqrt(D) is already folded into Wq, so s = Q K^T is the scaled score.
        s = jax.lax.dot_general(q.astype(bf16), k.astype(bf16),
                                (((1,), (1,)), ((), ())),
                                preferred_element_type=jnp.float32)
        # TODO(synk): attn_mask is not applied (only the attn_mask=None path).
        s = s - jnp.max(s, axis=-1, keepdims=True)       # stable softmax (f32)
        p = jnp.exp(s)
        p = p * pl.reciprocal(jnp.sum(p, axis=-1, keepdims=True), approx=True)
        ctx = jnp.dot(p.astype(bf16), v.astype(bf16),
                      preferred_element_type=jnp.float32)
        attn = jnp.dot(ctx.astype(bf16), wo_ref[...],
                       preferred_element_type=jnp.float32) + bo

        x1 = x + attn                                    # residual (dropout = id)

        # ---- FFN: norm1 -> linear1 -> [dwconv] -> act -> linear2 ----
        h = _layernorm(x1, n1_g, n1_b)
        f = jnp.dot(h.astype(bf16), w1_ref[...],
                    preferred_element_type=jnp.float32) + bf1_ref[...]

        if flag == 'SA':
            # Depthwise 3x3 conv over the (H, W) token grid, channels-last.
            # out[n, c] = b[c] + sum_{dh,dw} w[c, dh+1, dw+1] * f[(h+dh)*W + w+dw, c]
            L = f.shape[0]
            dww = dww_ref[...]                           # (9, Dff) f32
            col = jax.lax.broadcasted_iota(jnp.int32, (L, 1), 0) % W
            acc = jnp.zeros_like(f)
            for dh in (-1, 0, 1):
                for dw in (-1, 0, 1):
                    sft = dh * W + dw
                    if sft > 0:
                        shifted = jnp.concatenate(
                            [f[sft:], jnp.zeros((sft, Dff), jnp.float32)], axis=0)
                    elif sft < 0:
                        shifted = jnp.concatenate(
                            [jnp.zeros((-sft, Dff), jnp.float32), f[:L + sft]],
                            axis=0)
                    else:
                        shifted = f
                    widx = 3 * (dh + 1) + (dw + 1)
                    tap = shifted * dww[widx:widx + 1]
                    if dw != 0:
                        ok = (col + dw >= 0) & (col + dw < W)
                        tap = jnp.where(ok, tap, 0.0)
                    acc = acc + tap
            f = acc + dwb_ref[...]

        if activation == 'relu':
            f = jnp.maximum(f, 0.0)
        else:                                            # gelu (tanh approx)
            f = jax.nn.gelu(f, approximate=True)

        f = jnp.dot(f.astype(bf16), w2_ref[...],
                    preferred_element_type=jnp.float32) + bf2

        o_ref[0] = _layernorm(x1 + f, n2_g, n2_b)

    return kernel


# ---------------------------------------------------------------------------
# Wrapper: EncoderLayer.forward
# ---------------------------------------------------------------------------
def encoder_layer_forward(x, params, H=None, W=None, attn_mask=None,
                          flag='TA', activation='relu'):
    # attn_mask accepted for signature parity; only attn_mask=None is supported.
    B, L, D = x.shape
    Dff = params["w1"].shape[1]
    if flag == 'SA':
        assert H is not None and W is not None and H * W == L

    kernel = _make_encoder_layer_kernel(flag, H, W, D, Dff, activation)

    def rep(shape):
        n = len(shape)
        return pl.BlockSpec(shape, lambda b, _n=n: (0,) * _n)

    in_specs = [
        pl.BlockSpec((1, L, D), lambda b: (b, 0, 0)),    # x
        rep((L, D)),                                     # pe (first L rows only)
        rep((D, 3 * D)), rep((1, 3 * D)),                # fused Wqkv (bf16), bqkv
        rep((D, D)),                                     # Wo (bf16)
        rep((D, Dff)), rep((Dff, D)),                    # W1, W2 (bf16)
        rep((8, D)),                                     # packed LN/bias vectors
        rep((1, Dff)),                                   # b1
    ]
    args = [x, params["pe"], params["wqkv"], params["bqkv"], params["wo"],
            params["w1"], params["w2"], params["vecd"], params["bf1"]]
    if flag == 'SA':
        in_specs += [rep((9, Dff)), rep((1, Dff))]       # dwconv weight/bias
        args += [params["dww"], params["dwb"]]

    return pl.pallas_call(
        kernel,
        out_shape=jax.ShapeDtypeStruct((B, L, D), jnp.float32),
        grid=(B,),
        in_specs=in_specs,
        out_specs=pl.BlockSpec((1, L, D), lambda b: (b, 0, 0)),
        compiler_params=pltpu.CompilerParams(
            dimension_semantics=("parallel",)),
    )(*args)


# ---------------------------------------------------------------------------
# Deterministic parameter initialization (synthetic, torch-default-like)
# ---------------------------------------------------------------------------
def init_encoder_layer_params(key, D, Dff, flag='TA', max_len=512):
    ks = jax.random.split(key, 7)
    sd = 1.0 / math.sqrt(D)
    sf = 1.0 / math.sqrt(Dff)

    wq = jax.random.normal(ks[0], (D, D), jnp.float32) * sd
    wk = jax.random.normal(ks[1], (D, D), jnp.float32) * sd
    wv = jax.random.normal(ks[2], (D, D), jnp.float32) * sd
    wo = jax.random.normal(ks[3], (D, D), jnp.float32) * sd
    # Fold the 1/sqrt(D) attention scale into the Q projection (and its bias).
    wq = wq * (1.0 / math.sqrt(D))
    wqkv = jnp.concatenate([wq, wk, wv], axis=1)         # (D, 3D)
    bqkv = jnp.zeros((1, 3 * D), jnp.float32)            # q-bias scale: 0 stays 0

    w1 = jax.random.normal(ks[4], (D, Dff), jnp.float32) * sd
    w2 = jax.random.normal(ks[5], (Dff, D), jnp.float32) * sf

    ones = jnp.ones((1, D), jnp.float32)
    zeros = jnp.zeros((1, D), jnp.float32)
    # packed rows: [pre_g, pre_b, n1_g, n1_b, n2_g, n2_b, bo, b2]
    vecd = jnp.concatenate([ones, zeros, ones, zeros, ones, zeros, zeros, zeros],
                           axis=0)
    bf1 = jnp.zeros((1, Dff), jnp.float32)

    # PositionalEncoding buffer (same formula as the torch module).
    pos = jnp.arange(max_len, dtype=jnp.float32)[:, None]
    div = jnp.exp(jnp.arange(0, D, 2, dtype=jnp.float32)
                  * (-math.log(10000.0) / D))
    pe = jnp.zeros((max_len, D), jnp.float32)
    pe = pe.at[:, 0::2].set(jnp.sin(pos * div))
    pe = pe.at[:, 1::2].set(jnp.cos(pos * div))

    params = dict(
        wqkv=wqkv.astype(jnp.bfloat16), bqkv=bqkv,
        wo=wo.astype(jnp.bfloat16),
        w1=w1.astype(jnp.bfloat16), w2=w2.astype(jnp.bfloat16),
        vecd=vecd, bf1=bf1, pe=pe,
    )
    if flag == 'SA':
        # depthwise 3x3 conv: row index = 3*(dh+1) + (dw+1), channels-last
        dww = jax.random.normal(ks[6], (9, Dff), jnp.float32) * (1.0 / 3.0)
        dwb = jnp.zeros((1, Dff), jnp.float32)
        params.update(dww=dww, dwb=dwb)
    return params


if __name__ == "__main__":
    B, L, D = 2, 16, 128          # lane-dense d_model
    Dff = 4 * D                   # d_ff = d_ff or 4 * d_model
    H = W = 4                     # used only by flag='SA' (H * W == L)

    root = jax.random.PRNGKey(0)
    kx, kp_ta, kp_sa = jax.random.split(root, 3)
    x = jax.random.normal(kx, (B, L, D), jnp.float32)

    # flag='TA' (module default): no DWConv inside the FFN
    p_ta = init_encoder_layer_params(kp_ta, D, Dff, flag='TA')
    out_ta = jax.block_until_ready(encoder_layer_forward(x, p_ta, flag='TA'))
    assert out_ta.shape == (B, L, D), out_ta.shape
    assert bool(jnp.all(jnp.isfinite(out_ta)))

    # flag='SA': depthwise 3x3 conv over the (H, W) token grid inside the FFN
    p_sa = init_encoder_layer_params(kp_sa, D, Dff, flag='SA')
    out_sa = jax.block_until_ready(
        encoder_layer_forward(x, p_sa, H=H, W=W, flag='SA'))
    assert out_sa.shape == (B, L, D), out_sa.shape
    assert bool(jnp.all(jnp.isfinite(out_sa)))

    print("KERNEL_OK")
</pallas_src>

<mosaic_0001>
module attributes {stable_mosaic.version = 11 : i64} {
  func.func @kernel(%arg0: i32, %arg1: memref<1x16x128xf32, #tpu.memory_space<vmem>>, %arg2: memref<16x128xf32, #tpu.memory_space<vmem>>, %arg3: memref<128x384xbf16, #tpu.memory_space<vmem>>, %arg4: memref<1x384xf32, #tpu.memory_space<vmem>>, %arg5: memref<128x128xbf16, #tpu.memory_space<vmem>>, %arg6: memref<128x512xbf16, #tpu.memory_space<vmem>>, %arg7: memref<512x128xbf16, #tpu.memory_space<vmem>>, %arg8: memref<8x128xf32, #tpu.memory_space<vmem>>, %arg9: memref<1x512xf32, #tpu.memory_space<vmem>>, %arg10: memref<1x16x128xf32, #tpu.memory_space<vmem>>) attributes {dimension_semantics = [#tpu.dimension_semantics<parallel>], iteration_bounds = array<i64: 2>, scalar_prefetch = 0 : i64, scratch_operands = 0 : i64, tpu.core_type = #tpu.core_type<tc>, window_params = [{transform_indices = @transform_0, window_bounds = array<i64: 1, 16, 128>}, {transform_indices = @transform_1, window_bounds = array<i64: 16, 128>}, {pipeline_mode = #tpu.pipeline_mode<synchronous>, transform_indices = @transform_2, window_bounds = array<i64: 128, 384>}, {pipeline_mode = #tpu.pipeline_mode<synchronous>, transform_indices = @transform_3, window_bounds = array<i64: 1, 384>}, {pipeline_mode = #tpu.pipeline_mode<synchronous>, transform_indices = @transform_4, window_bounds = array<i64: 128, 128>}, {pipeline_mode = #tpu.pipeline_mode<synchronous>, transform_indices = @transform_5, window_bounds = array<i64: 128, 512>}, {pipeline_mode = #tpu.pipeline_mode<synchronous>, transform_indices = @transform_6, window_bounds = array<i64: 512, 128>}, {pipeline_mode = #tpu.pipeline_mode<synchronous>, transform_indices = @transform_7, window_bounds = array<i64: 8, 128>}, {pipeline_mode = #tpu.pipeline_mode<synchronous>, transform_indices = @transform_8, window_bounds = array<i64: 1, 512>}, {transform_indices = @transform_9, window_bounds = array<i64: 1, 16, 128>}]} {
    %c0 = arith.constant 0 : index
    %c0_0 = arith.constant 0 : index
    %c0_1 = arith.constant 0 : index
    %0 = vector.load %arg1[%c0, %c0_0, %c0_1] : memref<1x16x128xf32, #tpu.memory_space<vmem>>, vector<1x16x128xf32>
    %1 = vector.shape_cast %0 : vector<1x16x128xf32> to vector<16x128xf32>
    %c0_2 = arith.constant 0 : index
    %c0_3 = arith.constant 0 : index
    %2 = vector.load %arg2[%c0_2, %c0_3] : memref<16x128xf32, #tpu.memory_space<vmem>>, vector<16x128xf32>
    %3 = arith.addf %1, %2 : vector<16x128xf32>
    %c0_4 = arith.constant 0 : index
    %c0_5 = arith.constant 0 : index
    %4 = vector.load %arg8[%c0_4, %c0_5] : memref<8x128xf32, #tpu.memory_space<vmem>>, vector<8x128xf32>
    %5 = vector.extract_strided_slice %4 {offsets = [0, 0], sizes = [1, 128], strides = [1, 1]} : vector<8x128xf32> to vector<1x128xf32>
    %6 = vector.extract_strided_slice %4 {offsets = [1, 0], sizes = [1, 128], strides = [1, 1]} : vector<8x128xf32> to vector<1x128xf32>
    %7 = vector.extract_strided_slice %4 {offsets = [2, 0], sizes = [1, 128], strides = [1, 1]} : vector<8x128xf32> to vector<1x128xf32>
    %8 = vector.extract_strided_slice %4 {offsets = [3, 0], sizes = [1, 128], strides = [1, 1]} : vector<8x128xf32> to vector<1x128xf32>
    %9 = vector.extract_strided_slice %4 {offsets = [4, 0], sizes = [1, 128], strides = [1, 1]} : vector<8x128xf32> to vector<1x128xf32>
    %10 = vector.extract_strided_slice %4 {offsets = [5, 0], sizes = [1, 128], strides = [1, 1]} : vector<8x128xf32> to vector<1x128xf32>
    %11 = vector.extract_strided_slice %4 {offsets = [6, 0], sizes = [1, 128], strides = [1, 1]} : vector<8x128xf32> to vector<1x128xf32>
    %12 = vector.extract_strided_slice %4 {offsets = [7, 0], sizes = [1, 128], strides = [1, 1]} : vector<8x128xf32> to vector<1x128xf32>
    %cst = arith.constant dense<0.000000e+00> : vector<16xf32>
    %13 = vector.multi_reduction <add>, %3, %cst [1] : vector<16x128xf32> to vector<16xf32>
    %14 = vector.shape_cast %13 : vector<16xf32> to vector<16x1xf32>
    %cst_6 = arith.constant 1.280000e+02 : f32
    %15 = vector.broadcast %cst_6 : f32 to vector<16x1xf32>
    %16 = arith.divf %14, %15 : vector<16x1xf32>
    %17 = vector.broadcast %16 : vector<16x1xf32> to vector<16x128xf32>
    %18 = arith.subf %3, %17 : vector<16x128xf32>
    %19 = arith.mulf %18, %18 : vector<16x128xf32>
    %cst_7 = arith.constant dense<0.000000e+00> : vector<16xf32>
    %20 = vector.multi_reduction <add>, %19, %cst_7 [1] : vector<16x128xf32> to vector<16xf32>
    %21 = vector.shape_cast %20 : vector<16xf32> to vector<16x1xf32>
    %cst_8 = arith.constant 1.280000e+02 : f32
    %22 = vector.broadcast %cst_8 : f32 to vector<16x1xf32>
    %23 = arith.divf %21, %22 : vector<16x1xf32>
    %24 = vector.broadcast %16 : vector<16x1xf32> to vector<16x128xf32>
    %25 = arith.subf %3, %24 : vector<16x128xf32>
    %cst_9 = arith.constant 9.99999974E-6 : f32
    %26 = vector.broadcast %cst_9 : f32 to vector<16x1xf32>
    %27 = arith.addf %23, %26 : vector<16x1xf32>
    %28 = math.rsqrt %27 : vector<16x1xf32>
    %29 = vector.broadcast %28 : vector<16x1xf32> to vector<16x128xf32>
    %30 = arith.mulf %25, %29 : vector<16x128xf32>
    %31 = vector.broadcast %5 : vector<1x128xf32> to vector<16x128xf32>
    %32 = arith.mulf %30, %31 : vector<16x128xf32>
    %33 = vector.broadcast %6 : vector<1x128xf32> to vector<16x128xf32>
    %34 = arith.addf %32, %33 : vector<16x128xf32>
    %35 = arith.truncf %34 : vector<16x128xf32> to vector<16x128xbf16>
    %c0_10 = arith.constant 0 : index
    %c0_11 = arith.constant 0 : index
    %36 = vector.load %arg3[%c0_10, %c0_11] : memref<128x384xbf16, #tpu.memory_space<vmem>>, vector<128x384xbf16>
    %cst_12 = arith.constant dense<0.000000e+00> : vector<16x384xf32>
    %37 = tpu.matmul %35, %36, %cst_12 {dimension_numbers = #tpu.dot_dimension_numbers<[1], [0], [0], [1], [0, 0, 1, 1], [], []>} : vector<16x128xbf16>, vector<128x384xbf16>, vector<16x384xf32> -> vector<16x384xf32>
    %c0_13 = arith.constant 0 : index
    %c0_14 = arith.constant 0 : index
    %38 = vector.load %arg4[%c0_13, %c0_14] : memref<1x384xf32, #tpu.memory_space<vmem>>, vector<1x384xf32>
    %39 = vector.broadcast %38 : vector<1x384xf32> to vector<16x384xf32>
    %40 = arith.addf %37, %39 : vector<16x384xf32>
    %41 = vector.extract_strided_slice %40 {offsets = [0, 0], sizes = [16, 128], strides = [1, 1]} : vector<16x384xf32> to vector<16x128xf32>
    %42 = vector.extract_strided_slice %40 {offsets = [0, 128], sizes = [16, 128], strides = [1, 1]} : vector<16x384xf32> to vector<16x128xf32>
    %43 = vector.extract_strided_slice %40 {offsets = [0, 256], sizes = [16, 128], strides = [1, 1]} : vector<16x384xf32> to vector<16x128xf32>
    %44 = arith.truncf %41 : vector<16x128xf32> to vector<16x128xbf16>
    %45 = arith.truncf %42 : vector<16x128xf32> to vector<16x128xbf16>
    %cst_15 = arith.constant dense<0.000000e+00> : vector<16x16xf32>
    %46 = tpu.matmul %44, %45, %cst_15 {dimension_numbers = #tpu.dot_dimension_numbers<[1], [1], [0], [0], [0, 0, 1, 0], [], []>} : vector<16x128xbf16>, vector<16x128xbf16>, vector<16x16xf32> -> vector<16x16xf32>
    %cst_16 = arith.constant dense<0xFF800000> : vector<16xf32>
    %47 = vector.multi_reduction <maximumf>, %46, %cst_16 [1] : vector<16x16xf32> to vector<16xf32>
    %48 = vector.shape_cast %47 : vector<16xf32> to vector<16x1xf32>
    %49 = vector.broadcast %48 : vector<16x1xf32> to vector<16x16xf32>
    %50 = arith.subf %46, %49 : vector<16x16xf32>
    %51 = math.exp %50 : vector<16x16xf32>
    %cst_17 = arith.constant dense<0.000000e+00> : vector<16xf32>
    %52 = vector.multi_reduction <add>, %51, %cst_17 [1] : vector<16x16xf32> to vector<16xf32>
    %53 = vector.shape_cast %52 : vector<16xf32> to vector<16x1xf32>
    %54 = tpu.reciprocal %53 {approx = true} : vector<16x1xf32> -> vector<16x1xf32>
    %55 = vector.broadcast %54 : vector<16x1xf32> to vector<16x16xf32>
    %56 = arith.mulf %51, %55 : vector<16x16xf32>
    %57 = arith.truncf %56 : vector<16x16xf32> to vector<16x16xbf16>
    %58 = arith.truncf %43 : vector<16x128xf32> to vector<16x128xbf16>
    %cst_18 = arith.constant dense<0.000000e+00> : vector<16x128xf32>
    %59 = tpu.matmul %57, %58, %cst_18 {dimension_numbers = #tpu.dot_dimension_numbers<[1], [0], [0], [1], [0, 0, 1, 1], [], []>} : vector<16x16xbf16>, vector<16x128xbf16>, vector<16x128xf32> -> vector<16x128xf32>
    %60 = arith.truncf %59 : vector<16x128xf32> to vector<16x128xbf16>
    %c0_19 = arith.constant 0 : index
    %c0_20 = arith.constant 0 : index
    %61 = vector.load %arg5[%c0_19, %c0_20] : memref<128x128xbf16, #tpu.memory_space<vmem>>, vector<128x128xbf16>
    %cst_21 = arith.constant dense<0.000000e+00> : vector<16x128xf32>
    %62 = tpu.matmul %60, %61, %cst_21 {dimension_numbers = #tpu.dot_dimension_numbers<[1], [0], [0], [1], [0, 0, 1, 1], [], []>} : vector<16x128xbf16>, vector<128x128xbf16>, vector<16x128xf32> -> vector<16x128xf32>
    %63 = vector.broadcast %11 : vector<1x128xf32> to vector<16x128xf32>
    %64 = arith.addf %62, %63 : vector<16x128xf32>
    %65 = arith.addf %3, %64 : vector<16x128xf32>
    %cst_22 = arith.constant dense<0.000000e+00> : vector<16xf32>
    %66 = vector.multi_reduction <add>, %65, %cst_22 [1] : vector<16x128xf32> to vector<16xf32>
    %67 = vector.shape_cast %66 : vector<16xf32> to vector<16x1xf32>
    %cst_23 = arith.constant 1.280000e+02 : f32
    %68 = vector.broadcast %cst_23 : f32 to vector<16x1xf32>
    %69 = arith.divf %67, %68 : vector<16x1xf32>
    %70 = vector.broadcast %69 : vector<16x1xf32> to vector<16x128xf32>
    %71 = arith.subf %65, %70 : vector<16x128xf32>
    %72 = arith.mulf %71, %71 : vector<16x128xf32>
    %cst_24 = arith.constant dense<0.000000e+00> : vector<16xf32>
    %73 = vector.multi_reduction <add>, %72, %cst_24 [1] : vector<16x128xf32> to vector<16xf32>
    %74 = vector.shape_cast %73 : vector<16xf32> to vector<16x1xf32>
    %cst_25 = arith.constant 1.280000e+02 : f32
    %75 = vector.broadcast %cst_25 : f32 to vector<16x1xf32>
    %76 = arith.divf %74, %75 : vector<16x1xf32>
    %77 = vector.broadcast %69 : vector<16x1xf32> to vector<16x128xf32>
    %78 = arith.subf %65, %77 : vector<16x128xf32>
    %cst_26 = arith.constant 9.99999974E-6 : f32
    %79 = vector.broadcast %cst_26 : f32 to vector<16x1xf32>
    %80 = arith.addf %76, %79 : vector<16x1xf32>
    %81 = math.rsqrt %80 : vector<16x1xf32>
    %82 = vector.broadcast %81 : vector<16x1xf32> to vector<16x128xf32>
    %83 = arith.mulf %78, %82 : vector<16x128xf32>
    %84 = vector.broadcast %7 : vector<1x128xf32> to vector<16x128xf32>
    %85 = arith.mulf %83, %84 : vector<16x128xf32>
    %86 = vector.broadcast %8 : vector<1x128xf32> to vector<16x128xf32>
    %87 = arith.addf %85, %86 : vector<16x128xf32>
    %88 = arith.truncf %87 : vector<16x128xf32> to vector<16x128xbf16>
    %c0_27 = arith.constant 0 : index
    %c0_28 = arith.constant 0 : index
    %89 = vector.load %arg6[%c0_27, %c0_28] : memref<128x512xbf16, #tpu.memory_space<vmem>>, vector<128x512xbf16>
    %cst_29 = arith.constant dense<0.000000e+00> : vector<16x512xf32>
    %90 = tpu.matmul %88, %89, %cst_29 {dimension_numbers = #tpu.dot_dimension_numbers<[1], [0], [0], [1], [0, 0, 1, 1], [], []>} : vector<16x128xbf16>, vector<128x512xbf16>, vector<16x512xf32> -> vector<16x512xf32>
    %c0_30 = arith.constant 0 : index
    %c0_31 = arith.constant 0 : index
    %91 = vector.load %arg9[%c0_30, %c0_31] : memref<1x512xf32, #tpu.memory_space<vmem>>, vector<1x512xf32>
    %92 = vector.broadcast %91 : vector<1x512xf32> to vector<16x512xf32>
    %93 = arith.addf %90, %92 : vector<16x512xf32>
    %cst_32 = arith.constant 0.000000e+00 : f32
    %94 = vector.broadcast %cst_32 : f32 to vector<16x512xf32>
    %95 = arith.maximumf %93, %94 : vector<16x512xf32>
    %96 = arith.truncf %95 : vector<16x512xf32> to vector<16x512xbf16>
    %c0_33 = arith.constant 0 : index
    %c0_34 = arith.constant 0 : index
    %97 = vector.load %arg7[%c0_33, %c0_34] : memref<512x128xbf16, #tpu.memory_space<vmem>>, vector<512x128xbf16>
    %cst_35 = arith.constant dense<0.000000e+00> : vector<16x128xf32>
    %98 = tpu.matmul %96, %97, %cst_35 {dimension_numbers = #tpu.dot_dimension_numbers<[1], [0], [0], [1], [0, 0, 1, 1], [], []>} : vector<16x512xbf16>, vector<512x128xbf16>, vector<16x128xf32> -> vector<16x128xf32>
    %99 = vector.broadcast %12 : vector<1x128xf32> to vector<16x128xf32>
    %100 = arith.addf %98, %99 : vector<16x128xf32>
    %101 = arith.addf %65, %100 : vector<16x128xf32>
    %cst_36 = arith.constant dense<0.000000e+00> : vector<16xf32>
    %102 = vector.multi_reduction <add>, %101, %cst_36 [1] : vector<16x128xf32> to vector<16xf32>
    %103 = vector.shape_cast %102 : vector<16xf32> to vector<16x1xf32>
    %cst_37 = arith.constant 1.280000e+02 : f32
    %104 = vector.broadcast %cst_37 : f32 to vector<16x1xf32>
    %105 = arith.divf %103, %104 : vector<16x1xf32>
    %106 = vector.broadcast %105 : vector<16x1xf32> to vector<16x128xf32>
    %107 = arith.subf %101, %106 : vector<16x128xf32>
    %108 = arith.mulf %107, %107 : vector<16x128xf32>
    %cst_38 = arith.constant dense<0.000000e+00> : vector<16xf32>
    %109 = vector.multi_reduction <add>, %108, %cst_38 [1] : vector<16x128xf32> to vector<16xf32>
    %110 = vector.shape_cast %109 : vector<16xf32> to vector<16x1xf32>
    %cst_39 = arith.constant 1.280000e+02 : f32
    %111 = vector.broadcast %cst_39 : f32 to vector<16x1xf32>
    %112 = arith.divf %110, %111 : vector<16x1xf32>
    %113 = vector.broadcast %105 : vector<16x1xf32> to vector<16x128xf32>
    %114 = arith.subf %101, %113 : vector<16x128xf32>
    %cst_40 = arith.constant 9.99999974E-6 : f32
    %115 = vector.broadcast %cst_40 : f32 to vector<16x1xf32>
    %116 = arith.addf %112, %115 : vector<16x1xf32>
    %117 = math.rsqrt %116 : vector<16x1xf32>
    %118 = vector.broadcast %117 : vector<16x1xf32> to vector<16x128xf32>
    %119 = arith.mulf %114, %118 : vector<16x128xf32>
    %120 = vector.broadcast %9 : vector<1x128xf32> to vector<16x128xf32>
    %121 = arith.mulf %119, %120 : vector<16x128xf32>
    %122 = vector.broadcast %10 : vector<1x128xf32> to vector<16x128xf32>
    %123 = arith.addf %121, %122 : vector<16x128xf32>
    %c0_41 = arith.constant 0 : index
    %c0_42 = arith.constant 0 : index
    %c0_43 = arith.constant 0 : index
    %124 = vector.load %arg10[%c0_41, %c0_42, %c0_43] : memref<1x16x128xf32, #tpu.memory_space<vmem>>, vector<1x16x128xf32>
    %125 = vector.shape_cast %124 : vector<1x16x128xf32> to vector<16x128xf32>
    %126 = vector.shape_cast %123 : vector<16x128xf32> to vector<1x16x128xf32>
    tpu.vector_store %arg10[%c0_41, %c0_42, %c0_43], %126 {strides = array<i32>} : memref<1x16x128xf32, #tpu.memory_space<vmem>>, vector<1x16x128xf32>,
    return
  }
  func.func @transform_0(%arg0: i32) -> (i32, i32, i32) {
    %c0_i32 = arith.constant 0 : i32
    %c0_i32_0 = arith.constant 0 : i32
    %c0_i32_1 = arith.constant 0 : i32
    return %arg0, %c0_i32, %c0_i32_0 : i32, i32, i32
  }
  func.func @transform_1(%arg0: i32) -> (i32, i32) {
    %c0_i32 = arith.constant 0 : i32
    %c0_i32_0 = arith.constant 0 : i32
    %c0_i32_1 = arith.constant 0 : i32
    return %c0_i32, %c0_i32_0 : i32, i32
  }
  func.func @transform_2(%arg0: i32) -> (i32, i32) {
    %c0_i32 = arith.constant 0 : i32
    %c0_i32_0 = arith.constant 0 : i32
    %c0_i32_1 = arith.constant 0 : i32
    return %c0_i32, %c0_i32_0 : i32, i32
  }
  func.func @transform_3(%arg0: i32) -> (i32, i32) {
    %c0_i32 = arith.constant 0 : i32
    %c0_i32_0 = arith.constant 0 : i32
    %c0_i32_1 = arith.constant 0 : i32
    return %c0_i32, %c0_i32_0 : i32, i32
  }
  func.func @transform_4(%arg0: i32) -> (i32, i32) {
    %c0_i32 = arith.constant 0 : i32
    %c0_i32_0 = arith.constant 0 : i32
    %c0_i32_1 = arith.constant 0 : i32
    return %c0_i32, %c0_i32_0 : i32, i32
  }
  func.func @transform_5(%arg0: i32) -> (i32, i32) {
    %c0_i32 = arith.constant 0 : i32
    %c0_i32_0 = arith.constant 0 : i32
    %c0_i32_1 = arith.constant 0 : i32
    return %c0_i32, %c0_i32_0 : i32, i32
  }
  func.func @transform_6(%arg0: i32) -> (i32, i32) {
    %c0_i32 = arith.constant 0 : i32
    %c0_i32_0 = arith.constant 0 : i32
    %c0_i32_1 = arith.constant 0 : i32
    return %c0_i32, %c0_i32_0 : i32, i32
  }
  func.func @transform_7(%arg0: i32) -> (i32, i32) {
    %c0_i32 = arith.constant 0 : i32
    %c0_i32_0 = arith.constant 0 : i32
    %c0_i32_1 = arith.constant 0 : i32
    return %c0_i32, %c0_i32_0 : i32, i32
  }
  func.func @transform_8(%arg0: i32) -> (i32, i32) {
    %c0_i32 = arith.constant 0 : i32
    %c0_i32_0 = arith.constant 0 : i32
    %c0_i32_1 = arith.constant 0 : i32
    return %c0_i32, %c0_i32_0 : i32, i32
  }
  func.func @transform_9(%arg0: i32) -> (i32, i32, i32) {
    %c0_i32 = arith.constant 0 : i32
    %c0_i32_0 = arith.constant 0 : i32
    %c0_i32_1 = arith.constant 0 : i32
    return %arg0, %c0_i32, %c0_i32_0 : i32, i32, i32
  }
}

</mosaic_0001>

<llo_original>
// kernel: tpu_custom_call.1
$region0: #{tpu_custom_call.1}
  #allocation0 [shape = 'u32[]', space=smem, size = 0x4, offset = 0x4, fixed_abs, tag = 'smem constant byte address 0x4 - core index']
  #allocation1 [shape = 'u32[144,128]{1,0:T(1,128)}', space=vmem, size = 0x12000, scoped, tag = 'internal scratch']
  %s0 = inlined_call_operand.hbm [shape: f32[2,16,128], index: 0, kind: input, shape index: {}]
  %s1 = inlined_call_operand.hbm [shape: f32[512,128], index: 1, kind: input, shape index: {}]
  %s2 = inlined_call_operand.hbm [shape: bf16[128,384], index: 2, kind: input, shape index: {}]
  %s3 = inlined_call_operand.hbm [shape: f32[1,384], index: 3, kind: input, shape index: {}]
  %s4 = inlined_call_operand.hbm [shape: bf16[128,128], index: 4, kind: input, shape index: {}]
  %s5 = inlined_call_operand.hbm [shape: bf16[128,512], index: 5, kind: input, shape index: {}]
  %s6 = inlined_call_operand.hbm [shape: bf16[512,128], index: 6, kind: input, shape index: {}]
  %s7 = inlined_call_operand.vmem [shape: f32[8,128], index: 7, kind: input, shape index: {}]
  %s8 = inlined_call_operand.vmem [shape: f32[1,512], index: 8, kind: input, shape index: {}]
  %s9 = inlined_call_operand.hbm [shape: f32[2,16,128], index: 9, kind: output, shape index: {}]
  %s10 = sld [smem:[#allocation0]]
  $region97: #{tpu_custom_call.1} parent=0
    _
  %s12 = ssub.s32 1, %s10
  %s13 = scalar_select 0, %s12, %s10
  $region1: #{tpu_custom_call.1} parent=0
    #allocation2 [shape = 'u8[16384]{0}', space=vmem, size = 0x4000, scoped, tag = 'input window, operand 0']
    #allocation3 [shape = 's32[2]{0}', space=sflag, size = 0x8, scoped, tag = 'scoped memory for tpu_custom_call.1']
    #allocation4 [shape = 's32[2]{0}', space=sflag, size = 0x8, scoped, tag = 'scoped memory for tpu_custom_call.1']
    #allocation5 [shape = 'u8[8192]{0}', space=vmem, size = 0x2000, scoped, tag = 'input window, operand 1, single buffered']
    #allocation6 [shape = 's32[1]{0}', space=sflag, size = 0x4, scoped, tag = 'scoped memory for tpu_custom_call.1']
    #allocation7 [shape = 'u8[98304]{0}', space=vmem, size = 0x18000, scoped, tag = 'input window, operand 2, single buffered']
    #allocation8 [shape = 'u8[1536]{0}', space=vmem, size = 0x800, scoped, tag = 'input window, operand 3, single buffered']
    #allocation9 [shape = 's32[1]{0}', space=sflag, size = 0x4, scoped, tag = 'scoped memory for tpu_custom_call.1']
    #allocation10 [shape = 'u8[32768]{0}', space=vmem, size = 0x8000, scoped, tag = 'input window, operand 4, single buffered']
    #allocation11 [shape = 'u8[131072]{0}', space=vmem, size = 0x20000, scoped, tag = 'input window, operand 5, single buffered']
    #allocation12 [shape = 's32[1]{0}', space=sflag, size = 0x4, scoped, tag = 'scoped memory for tpu_custom_call.1']
    #allocation13 [shape = 'u8[131072]{0}', space=vmem, size = 0x20000, scoped, tag = 'input window, operand 6, single buffered']
    #allocation14 [shape = 'u8[16384]{0}', space=vmem, size = 0x4000, scoped, tag = 'output window, operand 0']
    %14 = vsyncpa [#allocation3], 0
    %s15 = scalar_lea.sflag [#allocation3], 1
    %16 = vsyncpa %s15, 0
    %17 = vsyncpa [#allocation6], 0
    %18 = vsyncpa [#allocation9], 0
    %19 = vsyncpa [#allocation12], 0
    %20 = vsyncpa [#allocation4], 0
    %s21 = scalar_lea.sflag [#allocation4], 1
    %22 = vsyncpa %s21, 0
    loop: start=0, step=1, limit=4
    $region2: #{tpu_custom_call.1} parent=1 // loop_pre_header
      _
    $region3: #{tpu_custom_call.1} parent=1 // loop_header
      %s24 = sphi 0, %s28
      %p25 = scmp.ge.s32.totalorder %s24, 4
      %s34 = sphi 0, %s36
      %s37 = sphi 0, %s34
      %s38 = sphi 0, %s37
      %s54 = sphi 0, %s38
      %s58 = sphi 0, %s58
      %s60 = sphi 0, %s58
      %s61 = sphi 0, %s60
      %s75 = sphi 0, %s61
      %s79 = sphi 0, %s79
      %s81 = sphi 0, %s79
      %s82 = sphi 0, %s81
      %s96 = sphi 0, %s82
      %s100 = sphi 0, %s100
      %s102 = sphi 0, %s100
      %s103 = sphi 0, %s102
      %s117 = sphi 0, %s103
      %s121 = sphi 0, %s121
      %s123 = sphi 0, %s121
      %s124 = sphi 0, %s123
      %s138 = sphi 0, %s124
      %s142 = sphi 0, %s142
      %s144 = sphi 0, %s142
      %s145 = sphi 0, %s144
      %s159 = sphi 0, %s145
      %s163 = sphi 0, %s163
      %s165 = sphi 0, %s163
      %s166 = sphi 0, %s165
      %s180 = sphi 0, %s166
      %s184 = sphi 0, %s184
      %s186 = sphi 0, %s184
      %s187 = sphi 0, %s186
      %s201 = sphi 0, %s187
      %s205 = sphi 0, %s205
      %s207 = sphi 0, %s205
      %s208 = sphi 0, %s207
      %s222 = sphi 0, %s208
      %s228 = sphi 0, %s230
      %s231 = sphi 0, %s228
      %s232 = sphi 0, %s231
      %s248 = sphi 0, %s232
    $region4: #{tpu_custom_call.1} parent=1 // loop_header_branch
      %27 = sbr.rel (%p25) target = $region8
    $region5: #{tpu_custom_call.1} parent=1 // loop_body
      %s29 = ssub.s32 %s24, 1
      %s30 = ssub.s32 %s24, 2
      %s31 = sadd.s32 %s24, 1
      %s32 = ssub.s32 %s24, %s31
      %p33 = scmp.eq.s32.totalorder %s32, 0
      %s35 = sadd.s32 %s34, 1
      %s36 = scalar_select %p33, %s34, %s35
      %p39 = pneg %p33
      %p40 = scmp.eq.s32.totalorder %s24, 1
      %p41 = por %p39, %p40
      %p42 = scmp.ne.s32.totalorder %s34, %s37
      %p43 = scmp.eq.s32.totalorder %s24, 0
      %p44 = por %p42, %p43
      %p45 = scmp.ne.s32.totalorder %s34, %s37
      %p46 = scmp.eq.s32.totalorder %s29, 1
      %p47 = por %p45, %p46
      %p48 = scmp.ne.s32.totalorder %s37, %s38
      %p49 = scmp.eq.s32.totalorder %s29, 0
      %p50 = por %p48, %p49
      %p51 = scmp.ne.s32.totalorder %s37, %s38
      %p52 = scmp.eq.s32.totalorder %s30, 1
      %p53 = por %p51, %p52
      %p55 = scmp.ne.s32.totalorder %s38, %s54
      %p56 = scmp.eq.s32.totalorder %s30, 0
      %p57 = por %p55, %p56
      %s59 = sadd.s32 %s58, 1
      %p62 = scmp.eq.s32.totalorder %s24, 1
      %p63 = scmp.ne.s32.totalorder %s58, %s60
      %p64 = scmp.eq.s32.totalorder %s24, 0
      %p65 = por %p63, %p64
      %p66 = scmp.ne.s32.totalorder %s58, %s60
      %p67 = scmp.eq.s32.totalorder %s29, 1
      %p68 = por %p66, %p67
      %p69 = scmp.ne.s32.totalorder %s60, %s61
      %p70 = scmp.eq.s32.totalorder %s29, 0
      %p71 = por %p69, %p70
      %p72 = scmp.ne.s32.totalorder %s60, %s61
      %p73 = scmp.eq.s32.totalorder %s30, 1
      %p74 = por %p72, %p73
      %p76 = scmp.ne.s32.totalorder %s61, %s75
      %p77 = scmp.eq.s32.totalorder %s30, 0
      %p78 = por %p76, %p77
      %s80 = sadd.s32 %s79, 1
      %p83 = scmp.eq.s32.totalorder %s24, 1
      %p84 = scmp.ne.s32.totalorder %s79, %s81
      %p85 = scmp.eq.s32.totalorder %s24, 0
      %p86 = por %p84, %p85
      %p87 = scmp.ne.s32.totalorder %s79, %s81
      %p88 = scmp.eq.s32.totalorder %s29, 1
      %p89 = por %p87, %p88
      %p90 = scmp.ne.s32.totalorder %s81, %s82
      %p91 = scmp.eq.s32.totalorder %s29, 0
      %p92 = por %p90, %p91
      %p93 = scmp.ne.s32.totalorder %s81, %s82
      %p94 = scmp.eq.s32.totalorder %s30, 1
      %p95 = por %p93, %p94
      %p97 = scmp.ne.s32.totalorder %s82, %s96
      %p98 = scmp.eq.s32.totalorder %s30, 0
      %p99 = por %p97, %p98
      %s101 = sadd.s32 %s100, 1
      %p104 = scmp.eq.s32.totalorder %s24, 1
      %p105 = scmp.ne.s32.totalorder %s100, %s102
      %p106 = scmp.eq.s32.totalorder %s24, 0
      %p107 = por %p105, %p106
      %p108 = scmp.ne.s32.totalorder %s100, %s102
      %p109 = scmp.eq.s32.totalorder %s29, 1
      %p110 = por %p108, %p109
      %p111 = scmp.ne.s32.totalorder %s102, %s103
      %p112 = scmp.eq.s32.totalorder %s29, 0
      %p113 = por %p111, %p112
      %p114 = scmp.ne.s32.totalorder %s102, %s103
      %p115 = scmp.eq.s32.totalorder %s30, 1
      %p116 = por %p114, %p115
      %p118 = scmp.ne.s32.totalorder %s103, %s117
      %p119 = scmp.eq.s32.totalorder %s30, 0
      %p120 = por %p118, %p119
      %s122 = sadd.s32 %s121, 1
      %p125 = scmp.eq.s32.totalorder %s24, 1
      %p126 = scmp.ne.s32.totalorder %s121, %s123
      %p127 = scmp.eq.s32.totalorder %s24, 0
      %p128 = por %p126, %p127
      %p129 = scmp.ne.s32.totalorder %s121, %s123
      %p130 = scmp.eq.s32.totalorder %s29, 1
      %p131 = por %p129, %p130
      %p132 = scmp.ne.s32.totalorder %s123, %s124
      %p133 = scmp.eq.s32.totalorder %s29, 0
      %p134 = por %p132, %p133
      %p135 = scmp.ne.s32.totalorder %s123, %s124
      %p136 = scmp.eq.s32.totalorder %s30, 1
      %p137 = por %p135, %p136
      %p139 = scmp.ne.s32.totalorder %s124, %s138
      %p140 = scmp.eq.s32.totalorder %s30, 0
      %p141 = por %p139, %p140
      %s143 = sadd.s32 %s142, 1
      %p146 = scmp.eq.s32.totalorder %s24, 1
      %p147 = scmp.ne.s32.totalorder %s142, %s144
      %p148 = scmp.eq.s32.totalorder %s24, 0
      %p149 = por %p147, %p148
      %p150 = scmp.ne.s32.totalorder %s142, %s144
      %p151 = scmp.eq.s32.totalorder %s29, 1
      %p152 = por %p150, %p151
      %p153 = scmp.ne.s32.totalorder %s144, %s145
      %p154 = scmp.eq.s32.totalorder %s29, 0
      %p155 = por %p153, %p154
      %p156 = scmp.ne.s32.totalorder %s144, %s145
      %p157 = scmp.eq.s32.totalorder %s30, 1
      %p158 = por %p156, %p157
      %p160 = scmp.ne.s32.totalorder %s145, %s159
      %p161 = scmp.eq.s32.totalorder %s30, 0
      %p162 = por %p160, %p161
      %s164 = sadd.s32 %s163, 1
      %p167 = scmp.eq.s32.totalorder %s24, 1
      %p168 = scmp.ne.s32.totalorder %s163, %s165
      %p169 = scmp.eq.s32.totalorder %s24, 0
      %p170 = por %p168, %p169
      %p171 = scmp.ne.s32.totalorder %s163, %s165
      %p172 = scmp.eq.s32.totalorder %s29, 1
      %p173 = por %p171, %p172
      %p174 = scmp.ne.s32.totalorder %s165, %s166
      %p175 = scmp.eq.s32.totalorder %s29, 0
      %p176 = por %p174, %p175
      %p177 = scmp.ne.s32.totalorder %s165, %s166
      %p178 = scmp.eq.s32.totalorder %s30, 1
      %p179 = por %p177, %p178
      %p181 = scmp.ne.s32.totalorder %s166, %s180
      %p182 = scmp.eq.s32.totalorder %s30, 0
      %p183 = por %p181, %p182
      %s185 = sadd.s32 %s184, 1
      %p188 = scmp.eq.s32.totalorder %s24, 1
      %p189 = scmp.ne.s32.totalorder %s184, %s186
      %p190 = scmp.eq.s32.totalorder %s24, 0
      %p191 = por %p189, %p190
      %p192 = scmp.ne.s32.totalorder %s184, %s186
      %p193 = scmp.eq.s32.totalorder %s29, 1
      %p194 = por %p192, %p193
      %p195 = scmp.ne.s32.totalorder %s186, %s187
      %p196 = scmp.eq.s32.totalorder %s29, 0
      %p197 = por %p195, %p196
      %p198 = scmp.ne.s32.totalorder %s186, %s187
      %p199 = scmp.eq.s32.totalorder %s30, 1
      %p200 = por %p198, %p199
      %p202 = scmp.ne.s32.totalorder %s187, %s201
      %p203 = scmp.eq.s32.totalorder %s30, 0
      %p204 = por %p202, %p203
      %s206 = sadd.s32 %s205, 1
      %p209 = scmp.eq.s32.totalorder %s24, 1
      %p210 = scmp.ne.s32.totalorder %s205, %s207
      %p211 = scmp.eq.s32.totalorder %s24, 0
      %p212 = por %p210, %p211
      %p213 = scmp.ne.s32.totalorder %s205, %s207
      %p214 = scmp.eq.s32.totalorder %s29, 1
      %p215 = por %p213, %p214
      %p216 = scmp.ne.s32.totalorder %s207, %s208
      %p217 = scmp.eq.s32.totalorder %s29, 0
      %p218 = por %p216, %p217
      %p219 = scmp.ne.s32.totalorder %s207, %s208
      %p220 = scmp.eq.s32.totalorder %s30, 1
      %p221 = por %p219, %p220
      %p223 = scmp.ne.s32.totalorder %s208, %s222
      %p224 = scmp.eq.s32.totalorder %s30, 0
      %p225 = por %p223, %p224
      %s226 = ssub.s32 %s24, %s31
      %p227 = scmp.eq.s32.totalorder %s226, 0
      %s229 = sadd.s32 %s228, 1
      %s230 = scalar_select %p227, %s228, %s229
      %p233 = pneg %p227
      %p234 = scmp.eq.s32.totalorder %s24, 1
      %p235 = por %p233, %p234
      %p236 = scmp.ne.s32.totalorder %s228, %s231
      %p237 = scmp.eq.s32.totalorder %s24, 0
      %p238 = por %p236, %p237
      %p239 = scmp.ne.s32.totalorder %s228, %s231
      %p240 = scmp.eq.s32.totalorder %s29, 1
      %p241 = por %p239, %p240
      %p242 = scmp.ne.s32.totalorder %s231, %s232
      %p243 = scmp.eq.s32.totalorder %s29, 0
      %p244 = por %p242, %p243
      %p245 = scmp.ne.s32.totalorder %s231, %s232
      %p246 = scmp.eq.s32.totalorder %s30, 1
      %p247 = por %p245, %p246
      %p249 = scmp.ne.s32.totalorder %s232, %s248
      %p250 = scmp.eq.s32.totalorder %s30, 0
      %p251 = por %p249, %p250
      %p252 = scmp.le.s32.totalorder 1, %s24
      %p253 = scmp.lt.s32.totalorder %s24, 3
      %p254 = pnand %p252, %p253
      %p255 = pneg %p254
      // Predicated region
      $region9: #{tpu_custom_call.1} parent=5 // pred_check
        _
      $region10: #{tpu_custom_call.1} parent=5 // pred_check_branch
        %257 = sbr.rel (%p254) target = $region12
      $region11: #{tpu_custom_call.1} parent=5 // pred_region
        %s258 = ssub.s32 %s24, 1
        // Predicated region
        $region13: #{tpu_custom_call.1} parent=11 // pred_check
          %p259 = pneg %p71
        $region14: #{tpu_custom_call.1} parent=11 // pred_check_branch
          %261 = sbr.rel (%p259) target = $region16
        $region15: #{tpu_custom_call.1} parent=11 // pred_region
          %s263 = ssub.s32 256, 256
          %264 = vsyncadd [#allocation6], %s263
          %s265 = sshll.u32 [#allocation5], 4
          %s266 = int_to_ptr.vmem [resolvable:$true] %s265
          %271 = dma.hbm_to_vmem [thread:$0]  %s1, 256, %s266, [#allocation6], 128, 128, 8
        $region16: #{tpu_custom_call.1} parent=11 // pred_fallthru
          _
        // Predicated region
        $region17: #{tpu_custom_call.1} parent=11 // pred_check
          %p272 = pneg %p92
        $region18: #{tpu_custom_call.1} parent=11 // pred_check_branch
          %274 = sbr.rel (%p272) target = $region20
        $region19: #{tpu_custom_call.1} parent=11 // pred_region
          %s276 = ssub.s32 3072, 3072
          %277 = vsyncadd [#allocation6], %s276
          %s278 = sshll.u32 [#allocation7], 4
          %s279 = int_to_ptr.vmem [resolvable:$true] %s278
          %284 = dma.hbm_to_vmem [thread:$0]  %s2, 3072, %s279, [#allocation6], 192, 192, 12
        $region20: #{tpu_custom_call.1} parent=11 // pred_fallthru
          _
        // Predicated region
        $region21: #{tpu_custom_call.1} parent=11 // pred_check
          %p285 = pneg %p113
        $region22: #{tpu_custom_call.1} parent=11 // pred_check_branch
          %287 = sbr.rel (%p285) target = $region24
        $region23: #{tpu_custom_call.1} parent=11 // pred_region
          %s289 = ssub.s32 48, 48
          %290 = vsyncadd [#allocation9], %s289
          %s292 = sshll.u32 [#allocation8], 4
          %s293 = int_to_ptr.vmem [resolvable:$true] %s292
          %295 = dma.hbm_to_vmem [thread:$0]  %s3, 48, %s293, [#allocation9]
        $region24: #{tpu_custom_call.1} parent=11 // pred_fallthru
          _
        // Predicated region
        $region25: #{tpu_custom_call.1} parent=11 // pred_check
          %p296 = pneg %p134
        $region26: #{tpu_custom_call.1} parent=11 // pred_check_branch
          %298 = sbr.rel (%p296) target = $region28
        $region27: #{tpu_custom_call.1} parent=11 // pred_region
          %s300 = ssub.s32 1024, 1024
          %301 = vsyncadd [#allocation9], %s300
          %s302 = sshll.u32 [#allocation10], 4
          %s303 = int_to_ptr.vmem [resolvable:$true] %s302
          %308 = dma.hbm_to_vmem [thread:$0]  %s4, 1024, %s303, [#allocation9], 64, 64, 4
        $region28: #{tpu_custom_call.1} parent=11 // pred_fallthru
          _
        // Predicated region
        $region29: #{tpu_custom_call.1} parent=11 // pred_check
          %p309 = pneg %p155
        $region30: #{tpu_custom_call.1} parent=11 // pred_check_branch
          %311 = sbr.rel (%p309) target = $region32
        $region31: #{tpu_custom_call.1} parent=11 // pred_region
          %s313 = ssub.s32 4096, 4096
          %314 = vsyncadd [#allocation12], %s313
          %s315 = sshll.u32 [#allocation11], 4
          %s316 = int_to_ptr.vmem [resolvable:$true] %s315
          %321 = dma.hbm_to_vmem [thread:$0]  %s5, 4096, %s316, [#allocation12], 256, 256, 16
        $region32: #{tpu_custom_call.1} parent=11 // pred_fallthru
          _
        // Predicated region
        $region33: #{tpu_custom_call.1} parent=11 // pred_check
          %p322 = pneg %p176
        $region34: #{tpu_custom_call.1} parent=11 // pred_check_branch
          %324 = sbr.rel (%p322) target = $region36
        $region35: #{tpu_custom_call.1} parent=11 // pred_region
          %s326 = ssub.s32 4096, 4096
          %327 = vsyncadd [#allocation12], %s326
          %s328 = sshll.u32 [#allocation13], 4
          %s329 = int_to_ptr.vmem [resolvable:$true] %s328
          %334 = dma.hbm_to_vmem [thread:$0]  %s6, 4096, %s329, [#allocation12], 64, 64, 4
        $region36: #{tpu_custom_call.1} parent=11 // pred_fallthru
          _
        // Predicated region
        $region37: #{tpu_custom_call.1} parent=11 // pred_check
          %p335 = pneg %p197
        $region38: #{tpu_custom_call.1} parent=11 // pred_check_branch
          %337 = sbr.rel (%p335) target = $region40
        $region39: #{tpu_custom_call.1} parent=11 // pred_region
          _
        $region40: #{tpu_custom_call.1} parent=11 // pred_fallthru
          _
        // Predicated region
        $region41: #{tpu_custom_call.1} parent=11 // pred_check
          %p338 = pneg %p218
        $region42: #{tpu_custom_call.1} parent=11 // pred_check_branch
          %340 = sbr.rel (%p338) target = $region44
        $region43: #{tpu_custom_call.1} parent=11 // pred_region
          _
        $region44: #{tpu_custom_call.1} parent=11 // pred_fallthru
          _
      $region12: #{tpu_custom_call.1} parent=5 // pred_fallthru
        _
      %p341 = scmp.lt.s32.totalorder %s24, 2
      // Predicated region
      $region45: #{tpu_custom_call.1} parent=5 // pred_check
        %p342 = pneg %p341
      $region46: #{tpu_custom_call.1} parent=5 // pred_check_branch
        %344 = sbr.rel (%p342) target = $region48
      $region47: #{tpu_custom_call.1} parent=5 // pred_region
        // Predicated region
        $region49: #{tpu_custom_call.1} parent=47 // pred_check
          %p345 = pneg %p44
        $region50: #{tpu_custom_call.1} parent=47 // pred_check_branch
          %347 = sbr.rel (%p345) target = $region52
        $region51: #{tpu_custom_call.1} parent=47 // pred_region
          %s348 = sand.u32 %s34, 1
          %s349 = scalar_lea.sflag [#allocation3], %s348
          %s350 = sand.u32 %s34, 1
          %s351 = smul.addr %s350, 16
          %s352 = scalar_lea.vmem [#allocation2], %s351
          %s354 = ssub.s32 256, 256
          %355 = vsyncadd %s349, %s354
          %s356 = smul.addr %s24, 2
          %s357 = smul.addr %s356, 128
          %s358 = scalar_lea.hbm %s0, %s357
          %s359 = sshll.u32 %s352, 4
          %s360 = int_to_ptr.vmem [resolvable:$true] %s359
          %365 = dma.hbm_to_vmem [thread:$0]  %s358, 256, %s360, %s349, 128, 128, 8
        $region52: #{tpu_custom_call.1} parent=47 // pred_fallthru
          _
      $region48: #{tpu_custom_call.1} parent=5 // pred_fallthru
        _
      %p366 = scmp.le.s32.totalorder 1, %s24
      %p367 = scmp.lt.s32.totalorder %s24, 3
      %p368 = pnand %p366, %p367
      %p369 = pneg %p368
      // Predicated region
      $region53: #{tpu_custom_call.1} parent=5 // pred_check
        _
      $region54: #{tpu_custom_call.1} parent=5 // pred_check_branch
        %371 = sbr.rel (%p368) target = $region56
      $region55: #{tpu_custom_call.1} parent=5 // pred_region
        %s372 = ssub.s32 %s24, 1
        %s373 = sand.u32 %s37, 1
        %s374 = scalar_lea.sflag [#allocation3], %s373
        %s375 = sand.u32 %s37, 1
        %s376 = smul.addr %s375, 16
        %s377 = scalar_lea.vmem [#allocation2], %s376
        // Predicated region
        $region57: #{tpu_custom_call.1} parent=55 // pred_check
          %p378 = pneg %p50
        $region58: #{tpu_custom_call.1} parent=55 // pred_check_branch
          %380 = sbr.rel (%p378) target = $region60
        $region59: #{tpu_custom_call.1} parent=55 // pred_region
          %381 = dma.done %s374, 256
        $region60: #{tpu_custom_call.1} parent=55 // pred_fallthru
          _
        // Predicated region
        $region61: #{tpu_custom_call.1} parent=55 // pred_check
          %p382 = pneg %p71
        $region62: #{tpu_custom_call.1} parent=55 // pred_check_branch
          %384 = sbr.rel (%p382) target = $region64
        $region63: #{tpu_custom_call.1} parent=55 // pred_region
          %385 = dma.done [#allocation6], 256
        $region64: #{tpu_custom_call.1} parent=55 // pred_fallthru
          _
        // Predicated region
        $region65: #{tpu_custom_call.1} parent=55 // pred_check
          %p386 = pneg %p92
        $region66: #{tpu_custom_call.1} parent=55 // pred_check_branch
          %388 = sbr.rel (%p386) target = $region68
        $region67: #{tpu_custom_call.1} parent=55 // pred_region
          %389 = dma.done [#allocation6], 3072
        $region68: #{tpu_custom_call.1} parent=55 // pred_fallthru
          _
        // Predicated region
        $region69: #{tpu_custom_call.1} parent=55 // pred_check
          %p390 = pneg %p113
        $region70: #{tpu_custom_call.1} parent=55 // pred_check_branch
          %392 = sbr.rel (%p390) target = $region72
        $region71: #{tpu_custom_call.1} parent=55 // pred_region
          %393 = dma.done [#allocation9], 48
        $region72: #{tpu_custom_call.1} parent=55 // pred_fallthru
          _
        // Predicated region
        $region73: #{tpu_custom_call.1} parent=55 // pred_check
          %p394 = pneg %p134
        $region74: #{tpu_custom_call.1} parent=55 // pred_check_branch
          %396 = sbr.rel (%p394) target = $region76
        $region75: #{tpu_custom_call.1} parent=55 // pred_region
          %397 = dma.done [#allocation9], 1024
        $region76: #{tpu_custom_call.1} parent=55 // pred_fallthru
          _
        // Predicated region
        $region77: #{tpu_custom_call.1} parent=55 // pred_check
          %p398 = pneg %p155
        $region78: #{tpu_custom_call.1} parent=55 // pred_check_branch
          %400 = sbr.rel (%p398) target = $region80
        $region79: #{tpu_custom_call.1} parent=55 // pred_region
          %401 = dma.done [#allocation12], 4096
        $region80: #{tpu_custom_call.1} parent=55 // pred_fallthru
          _
        // Predicated region
        $region81: #{tpu_custom_call.1} parent=55 // pred_check
          %p402 = pneg %p176
        $region82: #{tpu_custom_call.1} parent=55 // pred_check_branch
          %404 = sbr.rel (%p402) target = $region84
        $region83: #{tpu_custom_call.1} parent=55 // pred_region
          %405 = dma.done [#allocation12], 4096
        $region84: #{tpu_custom_call.1} parent=55 // pred_fallthru
          _
        %s406 = sand.u32 %s37, 1
        %s407 = scalar_lea.sflag [#allocation3], %s406
        %s408 = sand.u32 %s37, 1
        %s409 = smul.addr %s408, 16
        %s410 = scalar_lea.vmem [#allocation2], %s409
        %p411 = pneg %p50
        %p412 = pneg %p47
        %p413 = pneg %p71
        %p414 = pneg %p68
        %p415 = pneg %p92
        %p416 = pneg %p89
        %p417 = pneg %p113
        %p418 = pneg %p110
        %p419 = pneg %p134
        %p420 = pneg %p131
        %p421 = pneg %p155
        %p422 = pneg %p152
        %p423 = pneg %p176
        %p424 = pneg %p173
        %p425 = pneg %p197
        %p426 = pneg %p194
        %p427 = pneg %p218
        %p428 = pneg %p215
        %p429 = pneg %p244
        %p430 = pneg %p241
        %s431 = sand.u32 %s231, 1
        %s432 = scalar_lea.sflag [#allocation4], %s431
        %s433 = sand.u32 %s231, 1
        %s434 = smul.addr %s433, 16
        %s435 = scalar_lea.vmem [#allocation14], %s434
        %v437 = vld [vmem:[%s377] sm:$0xff]
        %v438 = vld [vmem:[%s377 + $0x8] sm:$0xff]
        %v439 = vld [vmem:[#allocation5] sm:$0xff]
        %v440 = vld [vmem:[#allocation5 + $0x8] sm:$0xff]
        %v441 = vadd.f32 %v437, %v439
        %v442 = vadd.f32 %v438, %v440
        %v443 = vld [vmem:[%s7] sm:$0xff]
        %444 = vadd.xlane.f32.xlu0 %v441
        %v445 = vpop.xlane.xlu0 %444
        %446 = vadd.xlane.f32.xlu0 %v442
        %v447 = vpop.xlane.xlu0 %446
        %v448 = vrcp.pop 128.0
        %v449 = vmul.f32 %v445, %v448
        %v450 = vmul.f32 %v447, %v448
        %v451 = vsub.f32 %v441, %v449
        %v452 = vsub.f32 %v442, %v450
        %v453 = vmul.f32 %v451, %v451
        %v454 = vmul.f32 %v452, %v452
        %455 = vadd.xlane.f32.xlu0 %v453
        %v456 = vpop.xlane.xlu0 %455
        %457 = vadd.xlane.f32.xlu0 %v454
        %v458 = vpop.xlane.xlu0 %457
        %v459 = vmul.f32 %v456, %v448
        %v460 = vmul.f32 %v458, %v448
        %v461 = vadd.f32 %v459, 1e-05
        %v462 = vadd.f32 %v460, 1e-05
        %v463 = vrsqrt.pop %v461
        %v464 = vrsqrt.pop %v462
        %v465 = vmul.f32 %v451, %v463
        %v466 = vmul.f32 %v452, %v464
        %v467 = vlaneseq
        %v468 = vshrl.u32 %v467, 7
        %v469 = vsub.s32 0, %v468
        %v470 = vrot.slane %v443, %v469
        %v471 = vmul.f32 %v465, %v470
        %v472 = vmul.f32 %v466, %v470
        %v473 = vlaneseq
        %v474 = vshrl.u32 %v473, 7
        %v475 = vsub.s32 1, %v474
        %v476 = vrot.slane %v443, %v475
        %v477 = vadd.f32 %v471, %v476
        %v478 = vadd.f32 %v472, %v476
        %v479 = vpack.c.bf16 %v478, %v477
        %v480 = vld [vmem:[#allocation7] sm:$0xff]
        %v481 = vld [vmem:[#allocation7 + $0x8] sm:$0xf]
        %v482 = vld [vmem:[#allocation7 + $0xc] sm:$0xff]
        %v483 = vld [vmem:[#allocation7 + $0x14] sm:$0xf]
        %v484 = vld [vmem:[#allocation7 + $0x18] sm:$0xff]
        %v485 = vld [vmem:[#allocation7 + $0x20] sm:$0xf]
        %v486 = vld [vmem:[#allocation7 + $0x24] sm:$0xff]
        %v487 = vld [vmem:[#allocation7 + $0x2c] sm:$0xf]
        %v488 = vld [vmem:[#allocation7 + $0x30] sm:$0xff]
        %v489 = vld [vmem:[#allocation7 + $0x38] sm:$0xf]
        %v490 = vld [vmem:[#allocation7 + $0x3c] sm:$0xff]
        %v491 = vld [vmem:[#allocation7 + $0x44] sm:$0xf]
        %v492 = vld [vmem:[#allocation7 + $0x48] sm:$0xff]
        %v493 = vld [vmem:[#allocation7 + $0x50] sm:$0xf]
        %v494 = vld [vmem:[#allocation7 + $0x54] sm:$0xff]
        %v495 = vld [vmem:[#allocation7 + $0x5c] sm:$0xf]
        %v496 = vld [vmem:[#allocation7 + $0x60] sm:$0xff]
        %v497 = vld [vmem:[#allocation7 + $0x68] sm:$0xf]
        %v498 = vld [vmem:[#allocation7 + $0x6c] sm:$0xff]
        %v499 = vld [vmem:[#allocation7 + $0x74] sm:$0xf]
        %v500 = vld [vmem:[#allocation7 + $0x78] sm:$0xff]
        %v501 = vld [vmem:[#allocation7 + $0x80] sm:$0xf]
        %v502 = vld [vmem:[#allocation7 + $0x84] sm:$0xff]
        %v503 = vld [vmem:[#allocation7 + $0x8c] sm:$0xf]
        %v504 = vld [vmem:[#allocation7 + $0x90] sm:$0xff]
        %v505 = vld [vmem:[#allocation7 + $0x98] sm:$0xf]
        %v506 = vld [vmem:[#allocation7 + $0x9c] sm:$0xff]
        %v507 = vld [vmem:[#allocation7 + $0xa4] sm:$0xf]
        %v508 = vld [vmem:[#allocation7 + $0xa8] sm:$0xff]
        %v509 = vld [vmem:[#allocation7 + $0xb0] sm:$0xf]
        %v510 = vld [vmem:[#allocation7 + $0xb4] sm:$0xff]
        %v511 = vld [vmem:[#allocation7 + $0xbc] sm:$0xf]
        %v512 = vld [vmem:[#allocation8] sm:$0x7]
        %v514 = vlaneseq
        %v515 = vshrl.u32 %v514, 7
        %v516 = vsub.s32 0, %v515
        %v517 = vrot.slane %v512, %v516
        %v518 = vlaneseq
        %v519 = vshrl.u32 %v518, 7
        %v520 = vsub.s32 1, %v519
        %v521 = vrot.slane %v512, %v520
        %v522 = vlaneseq
        %v523 = vshrl.u32 %v522, 7
        %v524 = vsub.s32 2, %v523
        %v525 = vrot.slane %v512, %v524
        %v561 = vunpack.c.l.b16 %v480
        %v562 = vunpack.c.h.b16 %v480
        %v563 = vunpack.c.l.b16 %v481
        %v564 = vunpack.c.l.b16 %v482
        %v565 = vunpack.c.h.b16 %v482
        %v566 = vunpack.c.l.b16 %v483
        %v567 = vunpack.c.l.b16 %v484
        %v568 = vunpack.c.h.b16 %v484
        %v569 = vunpack.c.l.b16 %v485
        %v570 = vunpack.c.l.b16 %v486
        %v571 = vunpack.c.h.b16 %v486
        %v572 = vunpack.c.l.b16 %v487
        %v573 = vunpack.c.l.b16 %v488
        %v574 = vunpack.c.h.b16 %v488
        %v575 = vunpack.c.l.b16 %v489
        %v576 = vunpack.c.l.b16 %v490
        %v577 = vunpack.c.h.b16 %v490
        %v578 = vunpack.c.l.b16 %v491
        %v579 = vunpack.c.l.b16 %v492
        %v580 = vunpack.c.h.b16 %v492
        %v581 = vunpack.c.l.b16 %v493
        %v582 = vunpack.c.l.b16 %v494
        %v583 = vunpack.c.h.b16 %v494
        %v584 = vunpack.c.l.b16 %v495
        %v585 = vunpack.c.l.b16 %v496
        %v586 = vunpack.c.h.b16 %v496
        %v587 = vunpack.c.l.b16 %v497
        %v588 = vunpack.c.l.b16 %v498
        %v589 = vunpack.c.h.b16 %v498
        %v590 = vunpack.c.l.b16 %v499
        %v591 = vunpack.c.l.b16 %v500
        %v592 = vunpack.c.h.b16 %v500
        %v593 = vunpack.c.l.b16 %v501
        %v594 = vunpack.c.l.b16 %v502
        %v595 = vunpack.c.h.b16 %v502
        %v596 = vunpack.c.l.b16 %v503
        %v597 = vunpack.c.l.b16 %v504
        %v598 = vunpack.c.h.b16 %v504
        %v599 = vunpack.c.l.b16 %v505
        %v600 = vunpack.c.l.b16 %v506
        %v601 = vunpack.c.h.b16 %v506
        %v602 = vunpack.c.l.b16 %v507
        %v603 = vunpack.c.l.b16 %v508
        %v604 = vunpack.c.h.b16 %v508
        %v605 = vunpack.c.l.b16 %v509
        %v606 = vunpack.c.l.b16 %v510
        %v607 = vunpack.c.h.b16 %v510
        %v608 = vunpack.c.l.b16 %v511
        %v609 = vpack.c.b16 %v564, %v561
        %v610 = vpack.c.b16 %v565, %v562
        %v611 = vpack.c.b16 %v566, %v563
        %v612 = vpack.c.b16 %v570, %v567
        %v613 = vpack.c.b16 %v571, %v568
        %v614 = vpack.c.b16 %v572, %v569
        %v615 = vpack.c.b16 %v576, %v573
        %v616 = vpack.c.b16 %v577, %v574
        %v617 = vpack.c.b16 %v578, %v575
        %v618 = vpack.c.b16 %v582, %v579
        %v619 = vpack.c.b16 %v583, %v580
        %v620 = vpack.c.b16 %v584, %v581
        %v621 = vpack.c.b16 %v588, %v585
        %v622 = vpack.c.b16 %v589, %v586
        %v623 = vpack.c.b16 %v590, %v587
        %v624 = vpack.c.b16 %v594, %v591
        %v625 = vpack.c.b16 %v595, %v592
        %v626 = vpack.c.b16 %v596, %v593
        %v627 = vpack.c.b16 %v600, %v597
        %v628 = vpack.c.b16 %v601, %v598
        %v629 = vpack.c.b16 %v602, %v599
        %v630 = vpack.c.b16 %v606, %v603
        %v631 = vpack.c.b16 %v607, %v604
        %v632 = vpack.c.b16 %v608, %v605
        %657 = vmatprep.subr.bf16.mxu0 %v631
        %658 = vmatpush1.bf16.msra.mxu0 %v630
        %659 = vmatprep.subr.bf16.mxu0 %v628
        %660 = vmatpush1.bf16.msra.mxu0 %v627
        %661 = vmatprep.subr.bf16.mxu0 %v625
        %662 = vmatpush1.bf16.msra.mxu0 %v624
        %663 = vmatprep.subr.bf16.mxu0 %v622
        %664 = vmatpush1.bf16.msra.mxu0 %v621
        %665 = vmatprep.subr.bf16.mxu0 %v619
        %666 = vmatpush1.bf16.msra.mxu0 %v618
        %667 = vmatprep.subr.bf16.mxu0 %v616
        %668 = vmatpush1.bf16.msra.mxu0 %v615
        %669 = vmatprep.subr.bf16.mxu0 %v613
        %670 = vmatpush1.bf16.msra.mxu0 %v612
        %671 = vmatprep.subr.bf16.mxu0 %v610
        %672 = vmatpush1.bf16.msra.mxu0 %v609
        %673 = vmatprep.subr.bf16.mxu0 0
        %674 = vmatpush2.bf16.msra.mxu0 0
        %675 = vmatprep.subr.bf16.mxu0 0
        %676 = vmatpush2.bf16.msra.mxu0 0
        %677 = vmatprep.subr.bf16.mxu0 0
        %678 = vmatpush2.bf16.msra.mxu0 0
        %679 = vmatprep.subr.bf16.mxu0 0
        %680 = vmatpush2.bf16.msra.mxu0 0
        %681 = vmatprep.subr.bf16.mxu0 0
        %682 = vmatpush2.bf16.msra.mxu0 0
        %683 = vmatprep.subr.bf16.mxu0 0
        %684 = vmatpush2.bf16.msra.mxu0 0
        %685 = vmatprep.subr.bf16.mxu0 0
        %686 = vmatpush2.bf16.msra.mxu0 0
        %687 = vmatprep.subr.bf16.mxu0 0
        %688 = vmatpush2.bf16.msra.mxu0 0
        %689 = vmatprep.mubr.bf16.mxu0 0
        %690 = vmatmul.mubr.bf16.gmra.mxu0 %v479
        %v691 = vpop.f32.mrf.mxu0
        %v692 = vadd.f32 %v517, %v691
        %v693 = vpop.f32.mrf.mxu0
        %v694 = vadd.f32 %v521, %v693
        %v695 = vpop.f32.mrf.mxu0
        %v696 = vadd.f32 %v517, %v695
        %v697 = vpop.f32.mrf.mxu0
        %v698 = vadd.f32 %v521, %v697
        %699 = vdwg.mxu0
        %700 = vmatprep.subr.bf16.mxu0 0
        %701 = vmatpush1.bf16.msra.mxu0 %v632
        %702 = vmatprep.subr.bf16.mxu0 0
        %703 = vmatpush1.bf16.msra.mxu0 %v629
        %704 = vmatprep.subr.bf16.mxu0 0
        %705 = vmatpush1.bf16.msra.mxu0 %v626
        %706 = vmatprep.subr.bf16.mxu0 0
        %707 = vmatpush1.bf16.msra.mxu0 %v623
        %708 = vmatprep.subr.bf16.mxu0 0
        %709 = vmatpush1.bf16.msra.mxu0 %v620
        %710 = vmatprep.subr.bf16.mxu0 0
        %711 = vmatpush1.bf16.msra.mxu0 %v617
        %712 = vmatprep.subr.bf16.mxu0 0
        %713 = vmatpush1.bf16.msra.mxu0 %v614
        %714 = vmatprep.subr.bf16.mxu0 0
        %715 = vmatpush1.bf16.msra.mxu0 %v611
        %716 = vmatprep.subr.bf16.mxu0 0
        %717 = vmatpush2.bf16.msra.mxu0 0
        %718 = vmatprep.subr.bf16.mxu0 0
        %719 = vmatpush2.bf16.msra.mxu0 0
        %720 = vmatprep.subr.bf16.mxu0 0
        %721 = vmatpush2.bf16.msra.mxu0 0
        %722 = vmatprep.subr.bf16.mxu0 0
        %723 = vmatpush2.bf16.msra.mxu0 0
        %724 = vmatprep.subr.bf16.mxu0 0
        %725 = vmatpush2.bf16.msra.mxu0 0
        %726 = vmatprep.subr.bf16.mxu0 0
        %727 = vmatpush2.bf16.msra.mxu0 0
        %728 = vmatprep.subr.bf16.mxu0 0
        %729 = vmatpush2.bf16.msra.mxu0 0
        %730 = vmatprep.subr.bf16.mxu0 0
        %731 = vmatpush2.bf16.msra.mxu0 0
        %732 = vmatprep.mubr.bf16.mxu0 0
        %733 = vmatmul.mubr.bf16.gmra.mxu0 %v479
        %v734 = vpop.f32.mrf.mxu0
        %v735 = vadd.f32 %v525, %v734
        %v736 = vpop.f32.mrf.mxu0
        %v737 = vpop.f32.mrf.mxu0
        %v738 = vadd.f32 %v525, %v737
        %v739 = vpop.f32.mrf.mxu0
        %740 = vdwg.mxu0
        %v741 = vpack.c.bf16 %v696, %v692
        %v742 = vpack.c.bf16 %v698, %v694
        %743 = vmatprep.subr.bf16.mxu0 0
        %744 = vmatpush1.bf16.xpose.msra.mxu0 0
        %745 = vmatprep.subr.bf16.mxu0 0
        %746 = vmatpush1.bf16.xpose.msra.mxu0 0
        %747 = vmatprep.subr.bf16.mxu0 0
        %748 = vmatpush1.bf16.xpose.msra.mxu0 0
        %749 = vmatprep.subr.bf16.mxu0 0
        %750 = vmatpush1.bf16.xpose.msra.mxu0 0
        %751 = vmatprep.subr.bf16.mxu0 0
        %752 = vmatpush1.bf16.xpose.msra.mxu0 0
        %753 = vmatprep.subr.bf16.mxu0 0
        %754 = vmatpush1.bf16.xpose.msra.mxu0 0
        %755 = vmatprep.subr.bf16.mxu0 0
        %756 = vmatpush1.bf16.xpose.msra.mxu0 0
        %757 = vmatprep.subr.bf16.mxu0 0
        %758 = vmatpush1.bf16.xpose.msra.mxu0 %v742
        %759 = vmatprep.subr.bf16.mxu0 0
        %760 = vmatpush2.bf16.xpose.msra.mxu0 0
        %761 = vmatprep.subr.bf16.mxu0 0
        %762 = vmatpush2.bf16.xpose.msra.mxu0 0
        %763 = vmatprep.subr.bf16.mxu0 0
        %764 = vmatpush2.bf16.xpose.msra.mxu0 0
        %765 = vmatprep.subr.bf16.mxu0 0
        %766 = vmatpush2.bf16.xpose.msra.mxu0 0
        %767 = vmatprep.subr.bf16.mxu0 0
        %768 = vmatpush2.bf16.xpose.msra.mxu0 0
        %769 = vmatprep.subr.bf16.mxu0 0
        %770 = vmatpush2.bf16.xpose.msra.mxu0 0
        %771 = vmatprep.subr.bf16.mxu0 0
        %772 = vmatpush2.bf16.xpose.msra.mxu0 0
        %773 = vmatprep.subr.bf16.mxu0 0
        %774 = vmatpush2.bf16.xpose.msra.mxu0 0
        %775 = vmatprep.mubr.bf16.mxu0 0
        %776 = vmatmul.mubr.bf16.gmra.mxu0 %v741
        %v777 = vpop.f32.mrf.mxu0
        %v778 = vadd.f32 0.0, %v777
        %v779 = vpop.f32.mrf.mxu0
        %v780 = vpop.f32.mrf.mxu0
        %v781 = vadd.f32 0.0, %v780
        %v782 = vpop.f32.mrf.mxu0
        %783 = vdwg.mxu0
        %vm784 = vcmask 130048
        %v785 = vsel %vm784, %v778, -inf
        %786 = vmax.xlane.f32.xlu0 %v785
        %v787 = vpop.xlane.xlu0 %786
        %v788 = vsel %vm784, %v781, -inf
        %789 = vmax.xlane.f32.xlu0 %v788
        %v790 = vpop.xlane.xlu0 %789
        %v791 = vsub.f32 %v778, %v787
        %v792 = vsub.f32 %v781, %v790
        %v793 = vmul.f32 %v791, 1.442695
        %v794 = vpow.pop %v793
        %v795 = vmul.f32 %v792, 1.442695
        %v796 = vpow.pop %v795
        %v797 = vsel %vm784, %v794, 0.0
        %798 = vadd.xlane.f32.xlu0 %v797
        %v799 = vpop.xlane.xlu0 %798
        %v800 = vsel %vm784, %v796, 0.0
        %801 = vadd.xlane.f32.xlu0 %v800
        %v802 = vpop.xlane.xlu0 %801
        %v803 = vrcp.pop %v799
        %v804 = vrcp.pop %v802
        %v805 = vmul.f32 %v794, %v803
        %v806 = vmul.f32 %v796, %v804
        %v807 = vpack.c.bf16 %v806, %v805
        %v808 = vpack.c.bf16 %v738, %v735
        %v810 = vsel %vm784, %v807, 0
        %812 = vmatprep.subr.bf16.mxu0 0
        %813 = vmatpush1.bf16.msra.mxu0 0
        %814 = vmatprep.subr.bf16.mxu0 0
        %815 = vmatpush1.bf16.msra.mxu0 0
        %816 = vmatprep.subr.bf16.mxu0 0
        %817 = vmatpush1.bf16.msra.mxu0 0
        %818 = vmatprep.subr.bf16.mxu0 0
        %819 = vmatpush1.bf16.msra.mxu0 0
        %820 = vmatprep.subr.bf16.mxu0 0
        %821 = vmatpush1.bf16.msra.mxu0 0
        %822 = vmatprep.subr.bf16.mxu0 0
        %823 = vmatpush1.bf16.msra.mxu0 0
        %824 = vmatprep.subr.bf16.mxu0 0
        %825 = vmatpush1.bf16.msra.mxu0 0
        %826 = vmatprep.subr.bf16.mxu0 0
        %827 = vmatpush1.bf16.msra.mxu0 %v808
        %828 = vmatprep.subr.bf16.mxu0 0
        %829 = vmatpush2.bf16.msra.mxu0 0
        %830 = vmatprep.subr.bf16.mxu0 0
        %831 = vmatpush2.bf16.msra.mxu0 0
        %832 = vmatprep.subr.bf16.mxu0 0
        %833 = vmatpush2.bf16.msra.mxu0 0
        %834 = vmatprep.subr.bf16.mxu0 0
        %835 = vmatpush2.bf16.msra.mxu0 0
        %836 = vmatprep.subr.bf16.mxu0 0
        %837 = vmatpush2.bf16.msra.mxu0 0
        %838 = vmatprep.subr.bf16.mxu0 0
        %839 = vmatpush2.bf16.msra.mxu0 0
        %840 = vmatprep.subr.bf16.mxu0 0
        %841 = vmatpush2.bf16.msra.mxu0 0
        %842 = vmatprep.subr.bf16.mxu0 0
        %843 = vmatpush2.bf16.msra.mxu0 0
        %844 = vmatprep.mubr.bf16.mxu0 0
        %845 = vmatmul.mubr.bf16.gmra.mxu0 %v810
        %v846 = vpop.f32.mrf.mxu0
        %v847 = vadd.f32 0.0, %v846
        %v848 = vpop.f32.mrf.mxu0
        %v849 = vpop.f32.mrf.mxu0
        %v850 = vadd.f32 0.0, %v849
        %v851 = vpop.f32.mrf.mxu0
        %852 = vdwg.mxu0
        %v853 = vpack.c.bf16 %v850, %v847
        %v854 = vld [vmem:[#allocation10] sm:$0xf]
        %v855 = vld [vmem:[#allocation10 + $0x4] sm:$0xf]
        %v856 = vld [vmem:[#allocation10 + $0x8] sm:$0xf]
        %v857 = vld [vmem:[#allocation10 + $0xc] sm:$0xf]
        %v858 = vld [vmem:[#allocation10 + $0x10] sm:$0xf]
        %v859 = vld [vmem:[#allocation10 + $0x14] sm:$0xf]
        %v860 = vld [vmem:[#allocation10 + $0x18] sm:$0xf]
        %v861 = vld [vmem:[#allocation10 + $0x1c] sm:$0xf]
        %v862 = vld [vmem:[#allocation10 + $0x20] sm:$0xf]
        %v863 = vld [vmem:[#allocation10 + $0x24] sm:$0xf]
        %v864 = vld [vmem:[#allocation10 + $0x28] sm:$0xf]
        %v865 = vld [vmem:[#allocation10 + $0x2c] sm:$0xf]
        %v866 = vld [vmem:[#allocation10 + $0x30] sm:$0xf]
        %v867 = vld [vmem:[#allocation10 + $0x34] sm:$0xf]
        %v868 = vld [vmem:[#allocation10 + $0x38] sm:$0xf]
        %v869 = vld [vmem:[#allocation10 + $0x3c] sm:$0xf]
        %v870 = vlaneseq
        %v871 = vshrl.u32 %v870, 7
        %v872 = vsub.s32 6, %v871
        %v873 = vrot.slane %v443, %v872
        %v890 = vunpack.c.l.b16 %v854
        %v891 = vunpack.c.l.b16 %v855
        %v892 = vunpack.c.l.b16 %v856
        %v893 = vunpack.c.l.b16 %v857
        %v894 = vunpack.c.l.b16 %v858
        %v895 = vunpack.c.l.b16 %v859
        %v896 = vunpack.c.l.b16 %v860
        %v897 = vunpack.c.l.b16 %v861
        %v898 = vunpack.c.l.b16 %v862
        %v899 = vunpack.c.l.b16 %v863
        %v900 = vunpack.c.l.b16 %v864
        %v901 = vunpack.c.l.b16 %v865
        %v902 = vunpack.c.l.b16 %v866
        %v903 = vunpack.c.l.b16 %v867
        %v904 = vunpack.c.l.b16 %v868
        %v905 = vunpack.c.l.b16 %v869
        %v906 = vpack.c.b16 %v891, %v890
        %v907 = vpack.c.b16 %v893, %v892
        %v908 = vpack.c.b16 %v895, %v894
        %v909 = vpack.c.b16 %v897, %v896
        %v910 = vpack.c.b16 %v899, %v898
        %v911 = vpack.c.b16 %v901, %v900
        %v912 = vpack.c.b16 %v903, %v902
        %v913 = vpack.c.b16 %v905, %v904
        %922 = vmatprep.subr.bf16.mxu0 0
        %923 = vmatpush1.bf16.msra.mxu0 %v913
        %924 = vmatprep.subr.bf16.mxu0 0
        %925 = vmatpush1.bf16.msra.mxu0 %v912
        %926 = vmatprep.subr.bf16.mxu0 0
        %927 = vmatpush1.bf16.msra.mxu0 %v911
        %928 = vmatprep.subr.bf16.mxu0 0
        %929 = vmatpush1.bf16.msra.mxu0 %v910
        %930 = vmatprep.subr.bf16.mxu0 0
        %931 = vmatpush1.bf16.msra.mxu0 %v909
        %932 = vmatprep.subr.bf16.mxu0 0
        %933 = vmatpush1.bf16.msra.mxu0 %v908
        %934 = vmatprep.subr.bf16.mxu0 0
        %935 = vmatpush1.bf16.msra.mxu0 %v907
        %936 = vmatprep.subr.bf16.mxu0 0
        %937 = vmatpush1.bf16.msra.mxu0 %v906
        %938 = vmatprep.subr.bf16.mxu0 0
        %939 = vmatpush2.bf16.msra.mxu0 0
        %940 = vmatprep.subr.bf16.mxu0 0
        %941 = vmatpush2.bf16.msra.mxu0 0
        %942 = vmatprep.subr.bf16.mxu0 0
        %943 = vmatpush2.bf16.msra.mxu0 0
        %944 = vmatprep.subr.bf16.mxu0 0
        %945 = vmatpush2.bf16.msra.mxu0 0
        %946 = vmatprep.subr.bf16.mxu0 0
        %947 = vmatpush2.bf16.msra.mxu0 0
        %948 = vmatprep.subr.bf16.mxu0 0
        %949 = vmatpush2.bf16.msra.mxu0 0
        %950 = vmatprep.subr.bf16.mxu0 0
        %951 = vmatpush2.bf16.msra.mxu0 0
        %952 = vmatprep.subr.bf16.mxu0 0
        %953 = vmatpush2.bf16.msra.mxu0 0
        %954 = vmatprep.mubr.bf16.mxu0 0
        %955 = vmatmul.mubr.bf16.gmra.mxu0 %v853
        %v956 = vpop.f32.mrf.mxu0
        %v957 = vadd.f32 %v873, %v956
        %v958 = vpop.f32.mrf.mxu0
        %v959 = vpop.f32.mrf.mxu0
        %v960 = vadd.f32 %v873, %v959
        %v961 = vpop.f32.mrf.mxu0
        %962 = vdwg.mxu0
        %v963 = vadd.f32 %v441, %v957
        %v964 = vadd.f32 %v442, %v960
        %965 = vadd.xlane.f32.xlu0 %v963
        %v966 = vpop.xlane.xlu0 %965
        %967 = vadd.xlane.f32.xlu0 %v964
        %v968 = vpop.xlane.xlu0 %967
        %v969 = vmul.f32 %v966, %v448
        %v970 = vmul.f32 %v968, %v448
        %v971 = vsub.f32 %v963, %v969
        %v972 = vsub.f32 %v964, %v970
        %v973 = vmul.f32 %v971, %v971
        %v974 = vmul.f32 %v972, %v972
        %975 = vadd.xlane.f32.xlu0 %v973
        %v976 = vpop.xlane.xlu0 %975
        %977 = vadd.xlane.f32.xlu0 %v974
        %v978 = vpop.xlane.xlu0 %977
        %v979 = vmul.f32 %v976, %v448
        %v980 = vmul.f32 %v978, %v448
        %v981 = vadd.f32 %v979, 1e-05
        %v982 = vadd.f32 %v980, 1e-05
        %v983 = vrsqrt.pop %v981
        %v984 = vrsqrt.pop %v982
        %v985 = vmul.f32 %v971, %v983
        %v986 = vmul.f32 %v972, %v984
        %v987 = vlaneseq
        %v988 = vshrl.u32 %v987, 7
        %v989 = vsub.s32 2, %v988
        %v990 = vrot.slane %v443, %v989
        %v991 = vmul.f32 %v985, %v990
        %v992 = vmul.f32 %v986, %v990
        %v993 = vlaneseq
        %v994 = vshrl.u32 %v993, 7
        %v995 = vsub.s32 3, %v994
        %v996 = vrot.slane %v443, %v995
        %v997 = vadd.f32 %v991, %v996
        %v998 = vadd.f32 %v992, %v996
        %v999 = vpack.c.bf16 %v998, %v997
        %v1000 = vld [vmem:[#allocation11] sm:$0xff]
        %v1001 = vld [vmem:[#allocation11 + $0x8] sm:$0xff]
        %v1002 = vld [vmem:[#allocation11 + $0x10] sm:$0xff]
        %v1003 = vld [vmem:[#allocation11 + $0x18] sm:$0xff]
        %v1004 = vld [vmem:[#allocation11 + $0x20] sm:$0xff]
        %v1005 = vld [vmem:[#allocation11 + $0x28] sm:$0xff]
        %v1006 = vld [vmem:[#allocation11 + $0x30] sm:$0xff]
        %v1007 = vld [vmem:[#allocation11 + $0x38] sm:$0xff]
        %v1008 = vld [vmem:[#allocation11 + $0x40] sm:$0xff]
        %v1009 = vld [vmem:[#allocation11 + $0x48] sm:$0xff]
        %v1010 = vld [vmem:[#allocation11 + $0x50] sm:$0xff]
        %v1011 = vld [vmem:[#allocation11 + $0x58] sm:$0xff]
        %v1012 = vld [vmem:[#allocation11 + $0x60] sm:$0xff]
        %v1013 = vld [vmem:[#allocation11 + $0x68] sm:$0xff]
        %v1014 = vld [vmem:[#allocation11 + $0x70] sm:$0xff]
        %v1015 = vld [vmem:[#allocation11 + $0x78] sm:$0xff]
        %v1016 = vld [vmem:[#allocation11 + $0x80] sm:$0xff]
        %v1017 = vld [vmem:[#allocation11 + $0x88] sm:$0xff]
        %v1018 = vld [vmem:[#allocation11 + $0x90] sm:$0xff]
        %v1019 = vld [vmem:[#allocation11 + $0x98] sm:$0xff]
        %v1020 = vld [vmem:[#allocation11 + $0xa0] sm:$0xff]
        %v1021 = vld [vmem:[#allocation11 + $0xa8] sm:$0xff]
        %v1022 = vld [vmem:[#allocation11 + $0xb0] sm:$0xff]
        %v1023 = vld [vmem:[#allocation11 + $0xb8] sm:$0xff]
        %v1024 = vld [vmem:[#allocation11 + $0xc0] sm:$0xff]
        %v1025 = vld [vmem:[#allocation11 + $0xc8] sm:$0xff]
        %v1026 = vld [vmem:[#allocation11 + $0xd0] sm:$0xff]
        %v1027 = vld [vmem:[#allocation11 + $0xd8] sm:$0xff]
        %v1028 = vld [vmem:[#allocation11 + $0xe0] sm:$0xff]
        %v1029 = vld [vmem:[#allocation11 + $0xe8] sm:$0xff]
        %v1030 = vld [vmem:[#allocation11 + $0xf0] sm:$0xff]
        %v1031 = vld [vmem:[#allocation11 + $0xf8] sm:$0xff]
        %v1032 = vld [vmem:[%s8] sm:$0xf]
        %v1034 = vlaneseq
        %v1035 = vshrl.u32 %v1034, 7
        %v1036 = vsub.s32 0, %v1035
        %v1037 = vrot.slane %v1032, %v1036
        %v1038 = vlaneseq
        %v1039 = vshrl.u32 %v1038, 7
        %v1040 = vsub.s32 1, %v1039
        %v1041 = vrot.slane %v1032, %v1040
        %v1042 = vlaneseq
        %v1043 = vshrl.u32 %v1042, 7
        %v1044 = vsub.s32 2, %v1043
        %v1045 = vrot.slane %v1032, %v1044
        %v1046 = vlaneseq
        %v1047 = vshrl.u32 %v1046, 7
        %v1048 = vsub.s32 3, %v1047
        %v1049 = vrot.slane %v1032, %v1048
        %v1086 = vunpack.c.l.b16 %v1000
        %v1087 = vunpack.c.h.b16 %v1000
        %v1088 = vunpack.c.l.b16 %v1001
        %v1089 = vunpack.c.h.b16 %v1001
        %v1090 = vunpack.c.l.b16 %v1002
        %v1091 = vunpack.c.h.b16 %v1002
        %v1092 = vunpack.c.l.b16 %v1003
        %v1093 = vunpack.c.h.b16 %v1003
        %v1094 = vunpack.c.l.b16 %v1004
        %v1095 = vunpack.c.h.b16 %v1004
        %v1096 = vunpack.c.l.b16 %v1005
        %v1097 = vunpack.c.h.b16 %v1005
        %v1098 = vunpack.c.l.b16 %v1006
        %v1099 = vunpack.c.h.b16 %v1006
        %v1100 = vunpack.c.l.b16 %v1007
        %v1101 = vunpack.c.h.b16 %v1007
        %v1102 = vunpack.c.l.b16 %v1008
        %v1103 = vunpack.c.h.b16 %v1008
        %v1104 = vunpack.c.l.b16 %v1009
        %v1105 = vunpack.c.h.b16 %v1009
        %v1106 = vunpack.c.l.b16 %v1010
        %v1107 = vunpack.c.h.b16 %v1010
        %v1108 = vunpack.c.l.b16 %v1011
        %v1109 = vunpack.c.h.b16 %v1011
        %v1110 = vunpack.c.l.b16 %v1012
        %v1111 = vunpack.c.h.b16 %v1012
        %v1112 = vunpack.c.l.b16 %v1013
        %v1113 = vunpack.c.h.b16 %v1013
        %v1114 = vunpack.c.l.b16 %v1014
        %v1115 = vunpack.c.h.b16 %v1014
        %v1116 = vunpack.c.l.b16 %v1015
        %v1117 = vunpack.c.h.b16 %v1015
        %v1118 = vunpack.c.l.b16 %v1016
        %v1119 = vunpack.c.h.b16 %v1016
        %v1120 = vunpack.c.l.b16 %v1017
        %v1121 = vunpack.c.h.b16 %v1017
        %v1122 = vunpack.c.l.b16 %v1018
        %v1123 = vunpack.c.h.b16 %v1018
        %v1124 = vunpack.c.l.b16 %v1019
        %v1125 = vunpack.c.h.b16 %v1019
        %v1126 = vunpack.c.l.b16 %v1020
        %v1127 = vunpack.c.h.b16 %v1020
        %v1128 = vunpack.c.l.b16 %v1021
        %v1129 = vunpack.c.h.b16 %v1021
        %v1130 = vunpack.c.l.b16 %v1022
        %v1131 = vunpack.c.h.b16 %v1022
        %v1132 = vunpack.c.l.b16 %v1023
        %v1133 = vunpack.c.h.b16 %v1023
        %v1134 = vunpack.c.l.b16 %v1024
        %v1135 = vunpack.c.h.b16 %v1024
        %v1136 = vunpack.c.l.b16 %v1025
        %v1137 = vunpack.c.h.b16 %v1025
        %v1138 = vunpack.c.l.b16 %v1026
        %v1139 = vunpack.c.h.b16 %v1026
        %v1140 = vunpack.c.l.b16 %v1027
        %v1141 = vunpack.c.h.b16 %v1027
        %v1142 = vunpack.c.l.b16 %v1028
        %v1143 = vunpack.c.h.b16 %v1028
        %v1144 = vunpack.c.l.b16 %v1029
        %v1145 = vunpack.c.h.b16 %v1029
        %v1146 = vunpack.c.l.b16 %v1030
        %v1147 = vunpack.c.h.b16 %v1030
        %v1148 = vunpack.c.l.b16 %v1031
        %v1149 = vunpack.c.h.b16 %v1031
        %v1150 = vpack.c.b16 %v1090, %v1086
        %v1151 = vpack.c.b16 %v1091, %v1087
        %v1152 = vpack.c.b16 %v1092, %v1088
        %v1153 = vpack.c.b16 %v1093, %v1089
        %v1154 = vpack.c.b16 %v1098, %v1094
        %v1155 = vpack.c.b16 %v1099, %v1095
        %v1156 = vpack.c.b16 %v1100, %v1096
        %v1157 = vpack.c.b16 %v1101, %v1097
        %v1158 = vpack.c.b16 %v1106, %v1102
        %v1159 = vpack.c.b16 %v1107, %v1103
        %v1160 = vpack.c.b16 %v1108, %v1104
        %v1161 = vpack.c.b16 %v1109, %v1105
        %v1162 = vpack.c.b16 %v1114, %v1110
        %v1163 = vpack.c.b16 %v1115, %v1111
        %v1164 = vpack.c.b16 %v1116, %v1112
        %v1165 = vpack.c.b16 %v1117, %v1113
        %v1166 = vpack.c.b16 %v1122, %v1118
        %v1167 = vpack.c.b16 %v1123, %v1119
        %v1168 = vpack.c.b16 %v1124, %v1120
        %v1169 = vpack.c.b16 %v1125, %v1121
        %v1170 = vpack.c.b16 %v1130, %v1126
        %v1171 = vpack.c.b16 %v1131, %v1127
        %v1172 = vpack.c.b16 %v1132, %v1128
        %v1173 = vpack.c.b16 %v1133, %v1129
        %v1174 = vpack.c.b16 %v1138, %v1134
        %v1175 = vpack.c.b16 %v1139, %v1135
        %v1176 = vpack.c.b16 %v1140, %v1136
        %v1177 = vpack.c.b16 %v1141, %v1137
        %v1178 = vpack.c.b16 %v1146, %v1142
        %v1179 = vpack.c.b16 %v1147, %v1143
        %v1180 = vpack.c.b16 %v1148, %v1144
        %v1181 = vpack.c.b16 %v1149, %v1145
        %1214 = vmatprep.subr.bf16.mxu0 %v1179
        %1215 = vmatpush1.bf16.msra.mxu0 %v1178
        %1216 = vmatprep.subr.bf16.mxu0 %v1175
        %1217 = vmatpush1.bf16.msra.mxu0 %v1174
        %1218 = vmatprep.subr.bf16.mxu0 %v1171
        %1219 = vmatpush1.bf16.msra.mxu0 %v1170
        %1220 = vmatprep.subr.bf16.mxu0 %v1167
        %1221 = vmatpush1.bf16.msra.mxu0 %v1166
        %1222 = vmatprep.subr.bf16.mxu0 %v1163
        %1223 = vmatpush1.bf16.msra.mxu0 %v1162
        %1224 = vmatprep.subr.bf16.mxu0 %v1159
        %1225 = vmatpush1.bf16.msra.mxu0 %v1158
        %1226 = vmatprep.subr.bf16.mxu0 %v1155
        %1227 = vmatpush1.bf16.msra.mxu0 %v1154
        %1228 = vmatprep.subr.bf16.mxu0 %v1151
        %1229 = vmatpush1.bf16.msra.mxu0 %v1150
        %1230 = vmatprep.subr.bf16.mxu0 0
        %1231 = vmatpush2.bf16.msra.mxu0 0
        %1232 = vmatprep.subr.bf16.mxu0 0
        %1233 = vmatpush2.bf16.msra.mxu0 0
        %1234 = vmatprep.subr.bf16.mxu0 0
        %1235 = vmatpush2.bf16.msra.mxu0 0
        %1236 = vmatprep.subr.bf16.mxu0 0
        %1237 = vmatpush2.bf16.msra.mxu0 0
        %1238 = vmatprep.subr.bf16.mxu0 0
        %1239 = vmatpush2.bf16.msra.mxu0 0
        %1240 = vmatprep.subr.bf16.mxu0 0
        %1241 = vmatpush2.bf16.msra.mxu0 0
        %1242 = vmatprep.subr.bf16.mxu0 0
        %1243 = vmatpush2.bf16.msra.mxu0 0
        %1244 = vmatprep.subr.bf16.mxu0 0
        %1245 = vmatpush2.bf16.msra.mxu0 0
        %1246 = vmatprep.mubr.bf16.mxu0 0
        %1247 = vmatmul.mubr.bf16.gmra.mxu0 %v999
        %v1248 = vpop.f32.mrf.mxu0
        %v1249 = vadd.f32 %v1037, %v1248
        %v1250 = vpop.f32.mrf.mxu0
        %v1251 = vadd.f32 %v1041, %v1250
        %v1252 = vpop.f32.mrf.mxu0
        %v1253 = vadd.f32 %v1037, %v1252
        %v1254 = vpop.f32.mrf.mxu0
        %v1255 = vadd.f32 %v1041, %v1254
        %1256 = vdwg.mxu0
        %1257 = vmatprep.subr.bf16.mxu0 %v1181
        %1258 = vmatpush1.bf16.msra.mxu0 %v1180
        %1259 = vmatprep.subr.bf16.mxu0 %v1177
        %1260 = vmatpush1.bf16.msra.mxu0 %v1176
        %1261 = vmatprep.subr.bf16.mxu0 %v1173
        %1262 = vmatpush1.bf16.msra.mxu0 %v1172
        %1263 = vmatprep.subr.bf16.mxu0 %v1169
        %1264 = vmatpush1.bf16.msra.mxu0 %v1168
        %1265 = vmatprep.subr.bf16.mxu0 %v1165
        %1266 = vmatpush1.bf16.msra.mxu0 %v1164
        %1267 = vmatprep.subr.bf16.mxu0 %v1161
        %1268 = vmatpush1.bf16.msra.mxu0 %v1160
        %1269 = vmatprep.subr.bf16.mxu0 %v1157
        %1270 = vmatpush1.bf16.msra.mxu0 %v1156
        %1271 = vmatprep.subr.bf16.mxu0 %v1153
        %1272 = vmatpush1.bf16.msra.mxu0 %v1152
        %1273 = vmatprep.subr.bf16.mxu0 0
        %1274 = vmatpush2.bf16.msra.mxu0 0
        %1275 = vmatprep.subr.bf16.mxu0 0
        %1276 = vmatpush2.bf16.msra.mxu0 0
        %1277 = vmatprep.subr.bf16.mxu0 0
        %1278 = vmatpush2.bf16.msra.mxu0 0
        %1279 = vmatprep.subr.bf16.mxu0 0
        %1280 = vmatpush2.bf16.msra.mxu0 0
        %1281 = vmatprep.subr.bf16.mxu0 0
        %1282 = vmatpush2.bf16.msra.mxu0 0
        %1283 = vmatprep.subr.bf16.mxu0 0
        %1284 = vmatpush2.bf16.msra.mxu0 0
        %1285 = vmatprep.subr.bf16.mxu0 0
        %1286 = vmatpush2.bf16.msra.mxu0 0
        %1287 = vmatprep.subr.bf16.mxu0 0
        %1288 = vmatpush2.bf16.msra.mxu0 0
        %1289 = vmatprep.mubr.bf16.mxu0 0
        %1290 = vmatmul.mubr.bf16.gmra.mxu0 %v999
        %v1291 = vpop.f32.mrf.mxu0
        %v1292 = vadd.f32 %v1045, %v1291
        %v1293 = vpop.f32.mrf.mxu0
        %v1294 = vadd.f32 %v1049, %v1293
        %v1295 = vpop.f32.mrf.mxu0
        %v1296 = vadd.f32 %v1045, %v1295
        %v1297 = vpop.f32.mrf.mxu0
        %v1298 = vadd.f32 %v1049, %v1297
        %1299 = vdwg.mxu0
        %v1300 = vmax.f32 %v1249, 0.0
        %v1301 = vmax.f32 %v1251, 0.0
        %v1302 = vmax.f32 %v1292, 0.0
        %v1303 = vmax.f32 %v1294, 0.0
        %v1304 = vmax.f32 %v1253, 0.0
        %v1305 = vmax.f32 %v1255, 0.0
        %v1306 = vmax.f32 %v1296, 0.0
        %v1307 = vmax.f32 %v1298, 0.0
        %v1308 = vpack.c.bf16 %v1304, %v1300
        %v1309 = vpack.c.bf16 %v1305, %v1301
        %v1310 = vpack.c.bf16 %v1306, %v1302
        %v1311 = vpack.c.bf16 %v1307, %v1303
        %v1312 = vld [vmem:[#allocation13] sm:$0xf]
        %v1313 = vld [vmem:[#allocation13 + $0x4] sm:$0xf]
        %v1314 = vld [vmem:[#allocation13 + $0x8] sm:$0xf]
        %v1315 = vld [vmem:[#allocation13 + $0xc] sm:$0xf]
        %v1316 = vld [vmem:[#allocation13 + $0x10] sm:$0xf]
        %v1317 = vld [vmem:[#allocation13 + $0x14] sm:$0xf]
        %v1318 = vld [vmem:[#allocation13 + $0x18] sm:$0xf]
        %v1319 = vld [vmem:[#allocation13 + $0x1c] sm:$0xf]
        %v1320 = vld [vmem:[#allocation13 + $0x20] sm:$0xf]
        %v1321 = vld [vmem:[#allocation13 + $0x24] sm:$0xf]
        %v1322 = vld [vmem:[#allocation13 + $0x28] sm:$0xf]
        %v1323 = vld [vmem:[#allocation13 + $0x2c] sm:$0xf]
        %v1324 = vld [vmem:[#allocation13 + $0x30] sm:$0xf]
        %v1325 = vld [vmem:[#allocation13 + $0x34] sm:$0xf]
        %v1326 = vld [vmem:[#allocation13 + $0x38] sm:$0xf]
        %v1327 = vld [vmem:[#allocation13 + $0x3c] sm:$0xf]
        %v1328 = vld [vmem:[#allocation13 + $0x40] sm:$0xf]
        %v1329 = vld [vmem:[#allocation13 + $0x44] sm:$0xf]
        %v1330 = vld [vmem:[#allocation13 + $0x48] sm:$0xf]
        %v1331 = vld [vmem:[#allocation13 + $0x4c] sm:$0xf]
        %v1332 = vld [vmem:[#allocation13 + $0x50] sm:$0xf]
        %v1333 = vld [vmem:[#allocation13 + $0x54] sm:$0xf]
        %v1334 = vld [vmem:[#allocation13 + $0x58] sm:$0xf]
        %v1335 = vld [vmem:[#allocation13 + $0x5c] sm:$0xf]
        %v1336 = vld [vmem:[#allocation13 + $0x60] sm:$0xf]
        %v1337 = vld [vmem:[#allocation13 + $0x64] sm:$0xf]
        %v1338 = vld [vmem:[#allocation13 + $0x68] sm:$0xf]
        %v1339 = vld [vmem:[#allocation13 + $0x6c] sm:$0xf]
        %v1340 = vld [vmem:[#allocation13 + $0x70] sm:$0xf]
        %v1341 = vld [vmem:[#allocation13 + $0x74] sm:$0xf]
        %v1342 = vld [vmem:[#allocation13 + $0x78] sm:$0xf]
        %v1343 = vld [vmem:[#allocation13 + $0x7c] sm:$0xf]
        %v1344 = vld [vmem:[#allocation13 + $0x80] sm:$0xf]
        %v1345 = vld [vmem:[#allocation13 + $0x84] sm:$0xf]
        %v1346 = vld [vmem:[#allocation13 + $0x88] sm:$0xf]
        %v1347 = vld [vmem:[#allocation13 + $0x8c] sm:$0xf]
        %v1348 = vld [vmem:[#allocation13 + $0x90] sm:$0xf]
        %v1349 = vld [vmem:[#allocation13 + $0x94] sm:$0xf]
        %v1350 = vld [vmem:[#allocation13 + $0x98] sm:$0xf]
        %v1351 = vld [vmem:[#allocation13 + $0x9c] sm:$0xf]
        %v1352 = vld [vmem:[#allocation13 + $0xa0] sm:$0xf]
        %v1353 = vld [vmem:[#allocation13 + $0xa4] sm:$0xf]
        %v1354 = vld [vmem:[#allocation13 + $0xa8] sm:$0xf]
        %v1355 = vld [vmem:[#allocation13 + $0xac] sm:$0xf]
        %v1356 = vld [vmem:[#allocation13 + $0xb0] sm:$0xf]
        %v1357 = vld [vmem:[#allocation13 + $0xb4] sm:$0xf]
        %v1358 = vld [vmem:[#allocation13 + $0xb8] sm:$0xf]
        %v1359 = vld [vmem:[#allocation13 + $0xbc] sm:$0xf]
        %v1360 = vld [vmem:[#allocation13 + $0xc0] sm:$0xf]
        %v1361 = vld [vmem:[#allocation13 + $0xc4] sm:$0xf]
        %v1362 = vld [vmem:[#allocation13 + $0xc8] sm:$0xf]
        %v1363 = vld [vmem:[#allocation13 + $0xcc] sm:$0xf]
        %v1364 = vld [vmem:[#allocation13 + $0xd0] sm:$0xf]
        %v1365 = vld [vmem:[#allocation13 + $0xd4] sm:$0xf]
        %v1366 = vld [vmem:[#allocation13 + $0xd8] sm:$0xf]
        %v1367 = vld [vmem:[#allocation13 + $0xdc] sm:$0xf]
        %v1368 = vld [vmem:[#allocation13 + $0xe0] sm:$0xf]
        %v1369 = vld [vmem:[#allocation13 + $0xe4] sm:$0xf]
        %v1370 = vld [vmem:[#allocation13 + $0xe8] sm:$0xf]
        %v1371 = vld [vmem:[#allocation13 + $0xec] sm:$0xf]
        %v1372 = vld [vmem:[#allocation13 + $0xf0] sm:$0xf]
        %v1373 = vld [vmem:[#allocation13 + $0xf4] sm:$0xf]
        %v1374 = vld [vmem:[#allocation13 + $0xf8] sm:$0xf]
        %v1375 = vld [vmem:[#allocation13 + $0xfc] sm:$0xf]
        %v1376 = vlaneseq
        %v1377 = vshrl.u32 %v1376, 7
        %v1378 = vsub.s32 7, %v1377
        %v1379 = vrot.slane %v443, %v1378
        %v1444 = vunpack.c.l.b16 %v1312
        %v1445 = vunpack.c.l.b16 %v1313
        %v1446 = vunpack.c.l.b16 %v1314
        %v1447 = vunpack.c.l.b16 %v1315
        %v1448 = vunpack.c.l.b16 %v1316
        %v1449 = vunpack.c.l.b16 %v1317
        %v1450 = vunpack.c.l.b16 %v1318
        %v1451 = vunpack.c.l.b16 %v1319
        %v1452 = vunpack.c.l.b16 %v1320
        %v1453 = vunpack.c.l.b16 %v1321
        %v1454 = vunpack.c.l.b16 %v1322
        %v1455 = vunpack.c.l.b16 %v1323
        %v1456 = vunpack.c.l.b16 %v1324
        %v1457 = vunpack.c.l.b16 %v1325
        %v1458 = vunpack.c.l.b16 %v1326
        %v1459 = vunpack.c.l.b16 %v1327
        %v1460 = vunpack.c.l.b16 %v1328
        %v1461 = vunpack.c.l.b16 %v1329
        %v1462 = vunpack.c.l.b16 %v1330
        %v1463 = vunpack.c.l.b16 %v1331
        %v1464 = vunpack.c.l.b16 %v1332
        %v1465 = vunpack.c.l.b16 %v1333
        %v1466 = vunpack.c.l.b16 %v1334
        %v1467 = vunpack.c.l.b16 %v1335
        %v1468 = vunpack.c.l.b16 %v1336
        %v1469 = vunpack.c.l.b16 %v1337
        %v1470 = vunpack.c.l.b16 %v1338
        %v1471 = vunpack.c.l.b16 %v1339
        %v1472 = vunpack.c.l.b16 %v1340
        %v1473 = vunpack.c.l.b16 %v1341
        %v1474 = vunpack.c.l.b16 %v1342
        %v1475 = vunpack.c.l.b16 %v1343
        %v1476 = vunpack.c.l.b16 %v1344
        %v1477 = vunpack.c.l.b16 %v1345
        %v1478 = vunpack.c.l.b16 %v1346
        %v1479 = vunpack.c.l.b16 %v1347
        %v1480 = vunpack.c.l.b16 %v1348
        %v1481 = vunpack.c.l.b16 %v1349
        %v1482 = vunpack.c.l.b16 %v1350
        %v1483 = vunpack.c.l.b16 %v1351
        %v1484 = vunpack.c.l.b16 %v1352
        %v1485 = vunpack.c.l.b16 %v1353
        %v1486 = vunpack.c.l.b16 %v1354
        %v1487 = vunpack.c.l.b16 %v1355
        %v1488 = vunpack.c.l.b16 %v1356
        %v1489 = vunpack.c.l.b16 %v1357
        %v1490 = vunpack.c.l.b16 %v1358
        %v1491 = vunpack.c.l.b16 %v1359
        %v1492 = vunpack.c.l.b16 %v1360
        %v1493 = vunpack.c.l.b16 %v1361
        %v1494 = vunpack.c.l.b16 %v1362
        %v1495 = vunpack.c.l.b16 %v1363
        %v1496 = vunpack.c.l.b16 %v1364
        %v1497 = vunpack.c.l.b16 %v1365
        %v1498 = vunpack.c.l.b16 %v1366
        %v1499 = vunpack.c.l.b16 %v1367
        %v1500 = vunpack.c.l.b16 %v1368
        %v1501 = vunpack.c.l.b16 %v1369
        %v1502 = vunpack.c.l.b16 %v1370
        %v1503 = vunpack.c.l.b16 %v1371
        %v1504 = vunpack.c.l.b16 %v1372
        %v1505 = vunpack.c.l.b16 %v1373
        %v1506 = vunpack.c.l.b16 %v1374
        %v1507 = vunpack.c.l.b16 %v1375
        %v1508 = vpack.c.b16 %v1445, %v1444
        %v1509 = vpack.c.b16 %v1447, %v1446
        %v1510 = vpack.c.b16 %v1449, %v1448
        %v1511 = vpack.c.b16 %v1451, %v1450
        %v1512 = vpack.c.b16 %v1453, %v1452
        %v1513 = vpack.c.b16 %v1455, %v1454
        %v1514 = vpack.c.b16 %v1457, %v1456
        %v1515 = vpack.c.b16 %v1459, %v1458
        %v1516 = vpack.c.b16 %v1461, %v1460
        %v1517 = vpack.c.b16 %v1463, %v1462
        %v1518 = vpack.c.b16 %v1465, %v1464
        %v1519 = vpack.c.b16 %v1467, %v1466
        %v1520 = vpack.c.b16 %v1469, %v1468
        %v1521 = vpack.c.b16 %v1471, %v1470
        %v1522 = vpack.c.b16 %v1473, %v1472
        %v1523 = vpack.c.b16 %v1475, %v1474
        %v1524 = vpack.c.b16 %v1477, %v1476
        %v1525 = vpack.c.b16 %v1479, %v1478
        %v1526 = vpack.c.b16 %v1481, %v1480
        %v1527 = vpack.c.b16 %v1483, %v1482
        %v1528 = vpack.c.b16 %v1485, %v1484
        %v1529 = vpack.c.b16 %v1487, %v1486
        %v1530 = vpack.c.b16 %v1489, %v1488
        %v1531 = vpack.c.b16 %v1491, %v1490
        %v1532 = vpack.c.b16 %v1493, %v1492
        %v1533 = vpack.c.b16 %v1495, %v1494
        %v1534 = vpack.c.b16 %v1497, %v1496
        %v1535 = vpack.c.b16 %v1499, %v1498
        %v1536 = vpack.c.b16 %v1501, %v1500
        %v1537 = vpack.c.b16 %v1503, %v1502
        %v1538 = vpack.c.b16 %v1505, %v1504
        %v1539 = vpack.c.b16 %v1507, %v1506
        %1572 = vmatprep.subr.bf16.mxu0 0
        %1573 = vmatpush1.bf16.msra.mxu0 %v1515
        %1574 = vmatprep.subr.bf16.mxu0 0
        %1575 = vmatpush1.bf16.msra.mxu0 %v1514
        %1576 = vmatprep.subr.bf16.mxu0 0
        %1577 = vmatpush1.bf16.msra.mxu0 %v1513
        %1578 = vmatprep.subr.bf16.mxu0 0
        %1579 = vmatpush1.bf16.msra.mxu0 %v1512
        %1580 = vmatprep.subr.bf16.mxu0 0
        %1581 = vmatpush1.bf16.msra.mxu0 %v1511
        %1582 = vmatprep.subr.bf16.mxu0 0
        %1583 = vmatpush1.bf16.msra.mxu0 %v1510
        %1584 = vmatprep.subr.bf16.mxu0 0
        %1585 = vmatpush1.bf16.msra.mxu0 %v1509
        %1586 = vmatprep.subr.bf16.mxu0 0
        %1587 = vmatpush1.bf16.msra.mxu0 %v1508
        %1588 = vmatprep.subr.bf16.mxu0 0
        %1589 = vmatpush2.bf16.msra.mxu0 %v1523
        %1590 = vmatprep.subr.bf16.mxu0 0
        %1591 = vmatpush2.bf16.msra.mxu0 %v1522
        %1592 = vmatprep.subr.bf16.mxu0 0
        %1593 = vmatpush2.bf16.msra.mxu0 %v1521
        %1594 = vmatprep.subr.bf16.mxu0 0
        %1595 = vmatpush2.bf16.msra.mxu0 %v1520
        %1596 = vmatprep.subr.bf16.mxu0 0
        %1597 = vmatpush2.bf16.msra.mxu0 %v1519
        %1598 = vmatprep.subr.bf16.mxu0 0
        %1599 = vmatpush2.bf16.msra.mxu0 %v1518
        %1600 = vmatprep.subr.bf16.mxu0 0
        %1601 = vmatpush2.bf16.msra.mxu0 %v1517
        %1602 = vmatprep.subr.bf16.mxu0 0
        %1603 = vmatpush2.bf16.msra.mxu0 %v1516
        %1604 = vmatprep.mubr.bf16.mxu0 %v1309
        %1605 = vmatmul.mubr.bf16.gmra.mxu0 %v1308
        %v1606 = vpop.f32.mrf.mxu0
        %v1607 = vadd.f32 %v1379, %v1606
        %v1608 = vpop.f32.mrf.mxu0
        %v1609 = vpop.f32.mrf.mxu0
        %v1610 = vadd.f32 %v1379, %v1609
        %v1611 = vpop.f32.mrf.mxu0
        %1612 = vdwg.mxu0
        %1613 = vmatprep.subr.bf16.mxu0 0
        %1614 = vmatpush1.bf16.msra.mxu0 %v1531
        %1615 = vmatprep.subr.bf16.mxu0 0
        %1616 = vmatpush1.bf16.msra.mxu0 %v1530
        %1617 = vmatprep.subr.bf16.mxu0 0
        %1618 = vmatpush1.bf16.msra.mxu0 %v1529
        %1619 = vmatprep.subr.bf16.mxu0 0
        %1620 = vmatpush1.bf16.msra.mxu0 %v1528
        %1621 = vmatprep.subr.bf16.mxu0 0
        %1622 = vmatpush1.bf16.msra.mxu0 %v1527
        %1623 = vmatprep.subr.bf16.mxu0 0
        %1624 = vmatpush1.bf16.msra.mxu0 %v1526
        %1625 = vmatprep.subr.bf16.mxu0 0
        %1626 = vmatpush1.bf16.msra.mxu0 %v1525
        %1627 = vmatprep.subr.bf16.mxu0 0
        %1628 = vmatpush1.bf16.msra.mxu0 %v1524
        %1629 = vmatprep.subr.bf16.mxu0 0
        %1630 = vmatpush2.bf16.msra.mxu0 %v1539
        %1631 = vmatprep.subr.bf16.mxu0 0
        %1632 = vmatpush2.bf16.msra.mxu0 %v1538
        %1633 = vmatprep.subr.bf16.mxu0 0
        %1634 = vmatpush2.bf16.msra.mxu0 %v1537
        %1635 = vmatprep.subr.bf16.mxu0 0
        %1636 = vmatpush2.bf16.msra.mxu0 %v1536
        %1637 = vmatprep.subr.bf16.mxu0 0
        %1638 = vmatpush2.bf16.msra.mxu0 %v1535
        %1639 = vmatprep.subr.bf16.mxu0 0
        %1640 = vmatpush2.bf16.msra.mxu0 %v1534
        %1641 = vmatprep.subr.bf16.mxu0 0
        %1642 = vmatpush2.bf16.msra.mxu0 %v1533
        %1643 = vmatprep.subr.bf16.mxu0 0
        %1644 = vmatpush2.bf16.msra.mxu0 %v1532
        %1645 = vmatprep.mubr.bf16.mxu0 %v1311
        %1646 = vmatmul.mubr.bf16.gmra.mxu0 %v1310
        %v1647 = vpop.f32.mrf.mxu0
        %v1648 = vadd.f32 %v1607, %v1647
        %v1649 = vpop.f32.mrf.mxu0
        %v1650 = vpop.f32.mrf.mxu0
        %v1651 = vadd.f32 %v1610, %v1650
        %v1652 = vpop.f32.mrf.mxu0
        %1653 = vdwg.mxu0
        %v1654 = vadd.f32 %v963, %v1648
        %v1655 = vadd.f32 %v964, %v1651
        %1656 = vadd.xlane.f32.xlu0 %v1654
        %v1657 = vpop.xlane.xlu0 %1656
        %1658 = vadd.xlane.f32.xlu0 %v1655
        %v1659 = vpop.xlane.xlu0 %1658
        %v1660 = vmul.f32 %v1657, %v448
        %v1661 = vmul.f32 %v1659, %v448
        %v1662 = vsub.f32 %v1654, %v1660
        %v1663 = vsub.f32 %v1655, %v1661
        %v1664 = vmul.f32 %v1662, %v1662
        %v1665 = vmul.f32 %v1663, %v1663
        %1666 = vadd.xlane.f32.xlu0 %v1664
        %v1667 = vpop.xlane.xlu0 %1666
        %1668 = vadd.xlane.f32.xlu0 %v1665
        %v1669 = vpop.xlane.xlu0 %1668
        %v1670 = vmul.f32 %v1667, %v448
        %v1671 = vmul.f32 %v1669, %v448
        %v1672 = vadd.f32 %v1670, 1e-05
        %v1673 = vadd.f32 %v1671, 1e-05
        %v1674 = vrsqrt.pop %v1672
        %v1675 = vrsqrt.pop %v1673
        %v1676 = vmul.f32 %v1662, %v1674
        %v1677 = vmul.f32 %v1663, %v1675
        %v1678 = vlaneseq
        %v1679 = vshrl.u32 %v1678, 7
        %v1680 = vsub.s32 4, %v1679
        %v1681 = vrot.slane %v443, %v1680
        %v1682 = vmul.f32 %v1676, %v1681
        %v1683 = vmul.f32 %v1677, %v1681
        %v1684 = vlaneseq
        %v1685 = vshrl.u32 %v1684, 7
        %v1686 = vsub.s32 5, %v1685
        %v1687 = vrot.slane %v443, %v1686
        %v1688 = vadd.f32 %v1682, %v1687
        %v1689 = vadd.f32 %v1683, %v1687
        %1690 = vst [vmem:[%s435] sm:$0xff] %v1688
        %1691 = vst [vmem:[%s435 + $0x8] sm:$0xff] %v1689
        %s1692 = sand.u32 %s231, 1
        %s1693 = scalar_lea.sflag [#allocation4], %s1692
        %s1694 = sand.u32 %s231, 1
        %s1695 = smul.addr %s1694, 16
        %s1696 = scalar_lea.vmem [#allocation14], %s1695
        // Predicated region
        $region85: #{tpu_custom_call.1} parent=55 // pred_check
          %p1697 = pneg %p241
        $region86: #{tpu_custom_call.1} parent=55 // pred_check_branch
          %1699 = sbr.rel (%p1697) target = $region88
        $region87: #{tpu_custom_call.1} parent=55 // pred_region
          %s1701 = ssub.s32 256, 256
          %1702 = vsyncadd %s1693, %s1701
          %s1703 = smul.addr %s29, 2
          %s1704 = smul.addr %s1703, 128
          %s1705 = scalar_lea.hbm %s9, %s1704
          %s1706 = sshll.u32 %s1696, 4
          %s1707 = int_to_ptr.vmem [resolvable:$true] %s1706
          %1712 = dma.vmem_to_hbm [thread:$0]  %s1707, 256, %s1705, %s1693, 128, 128, 8
        $region88: #{tpu_custom_call.1} parent=55 // pred_fallthru
          _
      $region56: #{tpu_custom_call.1} parent=5 // pred_fallthru
        _
      %p1713 = scmp.le.s32.totalorder 2, %s24
      // Predicated region
      $region89: #{tpu_custom_call.1} parent=5 // pred_check
        %p1714 = pneg %p1713
      $region90: #{tpu_custom_call.1} parent=5 // pred_check_branch
        %1716 = sbr.rel (%p1714) target = $region92
      $region91: #{tpu_custom_call.1} parent=5 // pred_region
        %s1717 = ssub.s32 %s24, 2
        // Predicated region
        $region93: #{tpu_custom_call.1} parent=91 // pred_check
          %p1718 = pneg %p247
        $region94: #{tpu_custom_call.1} parent=91 // pred_check_branch
          %1720 = sbr.rel (%p1718) target = $region96
        $region95: #{tpu_custom_call.1} parent=91 // pred_region
          %s1721 = sand.u32 %s232, 1
          %s1722 = scalar_lea.sflag [#allocation4], %s1721
          %s1723 = sand.u32 %s232, 1
          %s1724 = smul.addr %s1723, 16
          %s1725 = scalar_lea.vmem [#allocation14], %s1724
          %1726 = dma.done %s1722, 256
        $region96: #{tpu_custom_call.1} parent=91 // pred_fallthru
          _
      $region92: #{tpu_custom_call.1} parent=5 // pred_fallthru
        _
    $region6: #{tpu_custom_call.1} parent=1 // loop_footer
      %s28 = sadd.s32 1, %s24
    $region7: #{tpu_custom_call.1} parent=1 // loop_footer_branch
      %23 = sbr.rel target = $region3
    $region8: #{tpu_custom_call.1} parent=1 // loop_exit
      _
    %1727 = vsyncpa [#allocation3], 1
    %s1728 = scalar_lea.sflag [#allocation3], 1
    %1729 = vsyncpa %s1728, 1
    %1730 = vsyncpa [#allocation6], 1
    %1731 = vsyncpa [#allocation9], 1
    %1732 = vsyncpa [#allocation12], 1
    %1733 = vsyncpa [#allocation4], 1
    %s1734 = scalar_lea.sflag [#allocation4], 1
    %1735 = vsyncpa %s1734, 1

</llo_original>
